<compile_context>
chip_gen: v7x
topology: tpu7x:2x2x1
jax: 0.10.0
libtpu: 0.0.40
codegen_flags: <defaults>
</compile_context>

<pallas_src>
import math
from functools import partial

import jax
import jax.numpy as jnp
from jax import lax
from jax.experimental import pallas as pl
from jax.experimental.pallas import tpu as pltpu


def _pick_tile(dim, target, align):
    """Largest tile <= target that divides `dim` and is a multiple of `align`.
    Falls back to the full dimension, but refuses silently-huge fallbacks."""
    if dim <= target:
        return dim
    t = (target // align) * align
    while t >= align:
        if dim % t == 0:
            return t
        t -= align
    if dim > 8 * target:
        raise ValueError(
            f"_pick_tile: no {align}-aligned tile <= {target} divides {dim}; "
            f"pad the dimension instead of using a {dim}-wide block.")
    return dim


# ----------------------------------------------------------------------------
# Kernel 1: tiled linear  y = x @ W + b   (QKV projection)
# ----------------------------------------------------------------------------
def _linear_kernel(x_ref, w_ref, b_ref, o_ref, acc_ref):
    @pl.when(pl.program_id(2) == 0)
    def _():
        acc_ref[...] = jnp.zeros_like(acc_ref)

    acc_ref[...] += jnp.dot(x_ref[...], w_ref[...],
                            preferred_element_type=jnp.float32)

    @pl.when(pl.program_id(2) == pl.num_programs(2) - 1)
    def _():
        o_ref[...] = (acc_ref[...] + b_ref[...].astype(jnp.float32)).astype(o_ref.dtype)


def linear(x, w, b, *, tm=512, tn=512, tk=None):
    # x: [M, K], w: [K, N], b: [1, N]
    M, K = x.shape
    N = w.shape[1]
    tm = _pick_tile(M, tm, 8)
    tn = _pick_tile(N, tn, 128)
    # Full-K reduction tile by default: removes per-k grid-step overhead and the
    # accumulator read-modify-write across k (fits easily for BERT-sized hidden).
    tk = K if tk is None else _pick_tile(K, tk, 128)
    grid = (M // tm, N // tn, K // tk)
    bytes_io = (M * K + K * N + M * N + N) * x.dtype.itemsize
    return pl.pallas_call(
        _linear_kernel,
        out_shape=jax.ShapeDtypeStruct((M, N), x.dtype),
        grid=grid,
        in_specs=[
            pl.BlockSpec((tm, tk), lambda i, j, k: (i, k)),
            pl.BlockSpec((tk, tn), lambda i, j, k: (k, j)),
            pl.BlockSpec((1, tn), lambda i, j, k: (0, j)),
        ],
        out_specs=pl.BlockSpec((tm, tn), lambda i, j, k: (i, j)),
        scratch_shapes=[pltpu.VMEM((tm, tn), jnp.float32)],
        compiler_params=pltpu.CompilerParams(
            dimension_semantics=("parallel", "parallel", "arbitrary")),
        cost_estimate=pl.CostEstimate(
            flops=int(2 * M * K * N),
            transcendentals=0,
            bytes_accessed=int(bytes_io)),
    )(x, w, b)


# ----------------------------------------------------------------------------
# Kernel 2: fused per-(batch, query-tile) attention + output dense projection
#   per head h:
#     s_h   = (Q_h * scale) @ K_h^T          -> matmul_result output (fp32)
#     p_h   = softmax(s_h + mask)
#     ctx[:, h*dh:(h+1)*dh] = p_h @ V_h       (fp32 VMEM scratch)
#   out = ctx @ W_out + b_out                 (single K=H matmul, MXU-deep)
# ----------------------------------------------------------------------------
def _attn_out_kernel(qkv_ref, mask_ref, wout_ref, bout_ref,
                     scores_ref, out_ref, ctx_ref, *, scale, num_heads, head_dim):
    # qkv_ref: (S, 3, H) lane-dense; mask_ref: (1, 1, 1, S) additive
    # wout_ref: (H, H); bout_ref: (1, H)
    # scores_ref: (1, nh, tq, S) fp32; out_ref: (tq, H); ctx_ref: (tq, H) fp32 scratch
    tq = out_ref.shape[0]
    S = qkv_ref.shape[0]
    q_start = pl.multiple_of(pl.program_id(1) * tq, tq)

    # Additive mask, cast + broadcast once (hoisted out of the unrolled head loop).
    mask = jnp.broadcast_to(mask_ref[0, 0].astype(jnp.float32), (tq, S))

    for h in range(num_heads):                      # nh is small & static -> unrolled
        lane = pl.ds(h * head_dim, head_dim)
        # fold 1/sqrt(dh) into Q (tq*dh mults instead of tq*S on the scores)
        q = qkv_ref[pl.ds(q_start, tq), 0, lane] * scale    # (tq, dh)
        k = qkv_ref[:, 1, lane]                              # (S,  dh)
        v = qkv_ref[:, 2, lane]                              # (S,  dh)

        # raw scaled scores (contract dh directly; no K transpose)
        s = lax.dot_general(q, k, dimension_numbers=(((1,), (1,)), ((), ())),
                            preferred_element_type=jnp.float32)       # (tq, S)
        scores_ref[0, h] = s.astype(scores_ref.dtype)

        # masked softmax (exact normalization)
        sm = s + mask
        m = jnp.max(sm, axis=-1, keepdims=True)
        e = jnp.exp(sm - m)
        l = jnp.sum(e, axis=-1, keepdims=True)
        p = e * (1.0 / l)

        # per-head context staged into VMEM scratch (no big live vreg accumulator)
        ctx_ref[:, lane] = jnp.dot(p.astype(v.dtype), v,
                                   preferred_element_type=jnp.float32)

    # single output projection: (tq, H) @ (H, H) -> K = H fills the MXU depth
    out = jnp.dot(ctx_ref[...].astype(wout_ref.dtype), wout_ref[...],
                  preferred_element_type=jnp.float32)
    out_ref[...] = (out + bout_ref[...].astype(jnp.float32)).astype(out_ref.dtype)


def attention_with_output_proj(qkv, attention_mask, w_out, b_out, *,
                               num_heads, tq_target=128):
    # qkv: [S, B, 3, H] lane-dense; attention_mask: [B, 1, 1, S] additive (fp32)
    S, B, three, H = qkv.shape
    assert three == 3 and H % num_heads == 0
    dh = H // num_heads
    tq = _pick_tile(S, tq_target, 8)
    n_q = S // tq
    scale = 1.0 / math.sqrt(dh)

    kernel = partial(_attn_out_kernel, scale=scale, num_heads=num_heads, head_dim=dh)

    flops = int(4 * B * num_heads * S * S * dh + 2 * B * S * H * H)
    bytes_io = int((3 * S * B * H + S * B * H + H * H + H + B * S) * qkv.dtype.itemsize
                   + B * num_heads * S * S * 4)

    # NOTE(v5e / very long S): raise vmem_limit_bytes or shrink tq; for S >= 2k a
    # key-tile grid axis with online softmax would be needed (full K/V held here).
    scores, out2d = pl.pallas_call(
        kernel,
        out_shape=(
            jax.ShapeDtypeStruct((B, num_heads, S, S), jnp.float32),   # raw scaled scores
            jax.ShapeDtypeStruct((S, B * H), qkv.dtype),               # seq-first, lane-dense
        ),
        grid=(B, n_q),
        in_specs=[
            # one lane-dense (S, 3, H) block per batch; fetched once per b
            pl.BlockSpec((S, None, 3, H), lambda b, qi: (0, b, 0, 0)),
            pl.BlockSpec((1, 1, 1, S),    lambda b, qi: (b, 0, 0, 0)),
            pl.BlockSpec((H, H),          lambda b, qi: (0, 0)),   # resident
            pl.BlockSpec((1, H),          lambda b, qi: (0, 0)),   # resident
        ],
        out_specs=(
            pl.BlockSpec((1, num_heads, tq, S), lambda b, qi: (b, 0, qi, 0)),
            pl.BlockSpec((tq, H),               lambda b, qi: (qi, b)),
        ),
        scratch_shapes=[pltpu.VMEM((tq, H), jnp.float32)],
        compiler_params=pltpu.CompilerParams(
            dimension_semantics=("parallel", "parallel")),
        cost_estimate=pl.CostEstimate(
            flops=flops,
            transcendentals=int(B * num_heads * S * S),
            bytes_accessed=bytes_io),
    )(qkv, attention_mask, w_out, b_out)

    output = out2d.reshape(S, B, H)          # free reshape, no transpose pass
    return scores, output


# ----------------------------------------------------------------------------
# Wrapper: full forward pass of AttentionComponent_modified
# ----------------------------------------------------------------------------
def attention_component_forward(hidden_states, attention_mask, params, num_heads,
                                mxu_dtype=None):
    """hidden_states: [S, B, H]; attention_mask: additive [B, 1, 1, S] or None.
    Returns (output [S, B, H], matmul_result [B*num_heads, S, S]).
    mxu_dtype=jnp.bfloat16 casts activations/weights for the MXU on v6e/v7x."""
    S, B, H = hidden_states.shape
    assert H % num_heads == 0

    if attention_mask is None:
        attention_mask = jnp.zeros((B, 1, 1, S), jnp.float32)
    attention_mask = attention_mask.astype(jnp.float32)

    x = hidden_states
    w_qkv, b_qkv = params["w_qkv"], params["b_qkv"]
    w_out, b_out = params["w_out"], params["b_out"]
    if mxu_dtype is not None:
        x, w_qkv, b_qkv, w_out, b_out = (
            a.astype(mxu_dtype) for a in (x, w_qkv, b_qkv, w_out, b_out))

    # QKV projection (tiled Pallas matmul); weight columns laid out as [3, nh, dh]
    x2d = x.reshape(S * B, H)
    qkv = linear(x2d, w_qkv, b_qkv)              # [S*B, 3H]
    qkv = qkv.reshape(S, B, 3, H)                # pure reshape (stays lane-dense in H)

    # fused attention + output dense (single Pallas kernel), seq-first output
    scores, output = attention_with_output_proj(
        qkv, attention_mask, w_out, b_out, num_heads=num_heads)

    matmul_result = scores.reshape(B * num_heads, S, S)
    return output.astype(hidden_states.dtype), matmul_result


def init_params(key, hidden_size):
    k1, k2, k3, k4 = jax.random.split(key, 4)
    std = 0.02
    return {
        "w_qkv": (std * jax.random.normal(k1, (hidden_size, 3 * hidden_size))).astype(jnp.float32),
        "b_qkv": (std * jax.random.normal(k2, (1, 3 * hidden_size))).astype(jnp.float32),
        "w_out": (std * jax.random.normal(k3, (hidden_size, hidden_size))).astype(jnp.float32),
        "b_out": (std * jax.random.normal(k4, (1, hidden_size))).astype(jnp.float32),
    }


# Pure-JAX reference (same math, same weight conventions) for a sanity check.
def _reference_forward(hidden_states, attention_mask, params, num_heads):
    S, B, H = hidden_states.shape
    dh = H // num_heads
    x = hidden_states.reshape(S * B, H)
    qkv = (x @ params["w_qkv"] + params["b_qkv"]).reshape(S, B, 3, num_heads, dh)
    q = jnp.transpose(qkv[:, :, 0], (1, 2, 0, 3))                # [B, nh, S, dh]
    k = jnp.transpose(qkv[:, :, 1], (1, 2, 0, 3))
    v = jnp.transpose(qkv[:, :, 2], (1, 2, 0, 3))
    scores = jnp.einsum("bhqd,bhkd->bhqk", q, k) / math.sqrt(dh)
    probs = jax.nn.softmax(scores + attention_mask, axis=-1)
    ctx = jnp.einsum("bhqk,bhkd->bhqd", probs, v)
    ctx = jnp.transpose(ctx, (2, 0, 1, 3)).reshape(S * B, H)
    out = (ctx @ params["w_out"] + params["b_out"]).reshape(S, B, H)
    return out, scores.reshape(B * num_heads, S, S)


# TODO(synk): only the default seq-first scaled-dot-product attention path of
# get_attention_mechanism is implemented (no rotary embeddings / attention dropout
# / skip_output_projection=True variants).

if __name__ == "__main__":
    S, B, H, NUM_HEADS = 16, 2, 128, 4

    key = jax.random.PRNGKey(0)
    k_x, k_p = jax.random.split(key)

    hidden_states = jax.random.normal(k_x, (S, B, H), dtype=jnp.float32)

    # additive attention mask [B, 1, 1, S]: mask out the last 4 tokens of batch 1
    mask = jnp.zeros((B, 1, 1, S), dtype=jnp.float32)
    mask = mask.at[1, 0, 0, -4:].set(-10000.0)

    params = init_params(k_p, H)

    fwd = jax.jit(lambda hs, m, p: attention_component_forward(hs, m, p, NUM_HEADS))
    output, matmul_result = fwd(hidden_states, mask, params)
    jax.block_until_ready((output, matmul_result))

    assert output.shape == (S, B, H)
    assert matmul_result.shape == (B * NUM_HEADS, S, S)

    ref_out, ref_scores = _reference_forward(hidden_states, mask, params, NUM_HEADS)
    assert jnp.allclose(matmul_result, ref_scores, atol=1e-3, rtol=1e-2), "scores mismatch"
    assert jnp.allclose(output, ref_out, atol=2e-3, rtol=2e-2), "output mismatch"

    print("KERNEL_OK")
</pallas_src>

<mosaic_0001>
module attributes {stable_mosaic.version = 11 : i64} {
  func.func @_linear_kernel(%arg0: i32, %arg1: i32, %arg2: i32, %arg3: memref<32x128xf32, #tpu.memory_space<vmem>>, %arg4: memref<128x384xf32, #tpu.memory_space<vmem>>, %arg5: memref<1x384xf32, #tpu.memory_space<vmem>>, %arg6: memref<32x384xf32, #tpu.memory_space<vmem>>, %arg7: memref<32x384xf32, #tpu.memory_space<vmem>>) attributes {dimension_semantics = [#tpu.dimension_semantics<parallel>, #tpu.dimension_semantics<parallel>, #tpu.dimension_semantics<arbitrary>], iteration_bounds = array<i64: 1, 1, 1>, scalar_prefetch = 0 : i64, scratch_operands = 1 : i64, tpu.core_type = #tpu.core_type<tc>, window_params = [{transform_indices = @transform_0, window_bounds = array<i64: 32, 128>}, {transform_indices = @transform_1, window_bounds = array<i64: 128, 384>}, {transform_indices = @transform_2, window_bounds = array<i64: 1, 384>}, {transform_indices = @transform_3, window_bounds = array<i64: 32, 384>}]} {
    %c0_i32 = arith.constant 0 : i32
    %0 = arith.cmpi eq, %arg2, %c0_i32 : i32
    %1 = arith.extui %0 : i1 to i32
    %c0_i32_0 = arith.constant 0 : i32
    %2 = arith.cmpi ne, %1, %c0_i32_0 : i32
    scf.if %2 {
      %cst_10 = arith.constant 0.000000e+00 : f32
      %12 = vector.broadcast %cst_10 : f32 to vector<32x384xf32>
      %c0_11 = arith.constant 0 : index
      %c0_12 = arith.constant 0 : index
      %13 = vector.load %arg7[%c0_11, %c0_12] : memref<32x384xf32, #tpu.memory_space<vmem>>, vector<32x384xf32>
      tpu.vector_store %arg7[%c0_11, %c0_12], %12 {strides = array<i32>} : memref<32x384xf32, #tpu.memory_space<vmem>>, vector<32x384xf32>,
    } else {
    }
    %c0 = arith.constant 0 : index
    %c0_1 = arith.constant 0 : index
    %3 = vector.load %arg7[%c0, %c0_1] : memref<32x384xf32, #tpu.memory_space<vmem>>, vector<32x384xf32>
    %c0_2 = arith.constant 0 : index
    %c0_3 = arith.constant 0 : index
    %4 = vector.load %arg3[%c0_2, %c0_3] : memref<32x128xf32, #tpu.memory_space<vmem>>, vector<32x128xf32>
    %c0_4 = arith.constant 0 : index
    %c0_5 = arith.constant 0 : index
    %5 = vector.load %arg4[%c0_4, %c0_5] : memref<128x384xf32, #tpu.memory_space<vmem>>, vector<128x384xf32>
    %cst = arith.constant dense<0.000000e+00> : vector<32x384xf32>
    %6 = tpu.matmul %4, %5, %cst {dimension_numbers = #tpu.dot_dimension_numbers<[1], [0], [0], [1], [0, 0, 1, 1], [], []>} : vector<32x128xf32>, vector<128x384xf32>, vector<32x384xf32> -> vector<32x384xf32>
    %7 = arith.addf %3, %6 : vector<32x384xf32>
    %c0_6 = arith.constant 0 : index
    %c0_7 = arith.constant 0 : index
    %8 = vector.load %arg7[%c0_6, %c0_7] : memref<32x384xf32, #tpu.memory_space<vmem>>, vector<32x384xf32>
    tpu.vector_store %arg7[%c0_6, %c0_7], %7 {strides = array<i32>} : memref<32x384xf32, #tpu.memory_space<vmem>>, vector<32x384xf32>,
    %c0_i32_8 = arith.constant 0 : i32
    %9 = arith.cmpi eq, %arg2, %c0_i32_8 : i32
    %10 = arith.extui %9 : i1 to i32
    %c0_i32_9 = arith.constant 0 : i32
    %11 = arith.cmpi ne, %10, %c0_i32_9 : i32
    scf.if %11 {
      %c0_10 = arith.constant 0 : index
      %c0_11 = arith.constant 0 : index
      %12 = vector.load %arg7[%c0_10, %c0_11] : memref<32x384xf32, #tpu.memory_space<vmem>>, vector<32x384xf32>
      %c0_12 = arith.constant 0 : index
      %c0_13 = arith.constant 0 : index
      %13 = vector.load %arg5[%c0_12, %c0_13] : memref<1x384xf32, #tpu.memory_space<vmem>>, vector<1x384xf32>
      %14 = vector.broadcast %13 : vector<1x384xf32> to vector<32x384xf32>
      %15 = arith.addf %12, %14 : vector<32x384xf32>
      %c0_14 = arith.constant 0 : index
      %c0_15 = arith.constant 0 : index
      %16 = vector.load %arg6[%c0_14, %c0_15] : memref<32x384xf32, #tpu.memory_space<vmem>>, vector<32x384xf32>
      tpu.vector_store %arg6[%c0_14, %c0_15], %15 {strides = array<i32>} : memref<32x384xf32, #tpu.memory_space<vmem>>, vector<32x384xf32>,
    } else {
    }
    return
  }
  func.func @transform_0(%arg0: i32, %arg1: i32, %arg2: i32) -> (i32, i32) {
    %c0_i32 = arith.constant 0 : i32
    return %arg0, %arg2 : i32, i32
  }
  func.func @transform_1(%arg0: i32, %arg1: i32, %arg2: i32) -> (i32, i32) {
    %c0_i32 = arith.constant 0 : i32
    return %arg2, %arg1 : i32, i32
  }
  func.func @transform_2(%arg0: i32, %arg1: i32, %arg2: i32) -> (i32, i32) {
    %c0_i32 = arith.constant 0 : i32
    %c0_i32_0 = arith.constant 0 : i32
    return %c0_i32, %arg1 : i32, i32
  }
  func.func @transform_3(%arg0: i32, %arg1: i32, %arg2: i32) -> (i32, i32) {
    %c0_i32 = arith.constant 0 : i32
    return %arg0, %arg1 : i32, i32
  }
}

module attributes {stable_mosaic.version = 11 : i64} {
  func.func @_attn_out_kernel(%arg0: i32, %arg1: i32, %arg2: memref<16x1x3x128xf32, #tpu.memory_space<vmem>>, %arg3: memref<1x1x1x16xf32, #tpu.memory_space<vmem>>, %arg4: memref<128x128xf32, #tpu.memory_space<vmem>>, %arg5: memref<1x128xf32, #tpu.memory_space<vmem>>, %arg6: memref<1x4x16x16xf32, #tpu.memory_space<vmem>>, %arg7: memref<16x128xf32, #tpu.memory_space<vmem>>, %arg8: memref<16x128xf32, #tpu.memory_space<vmem>>) attributes {dimension_semantics = [#tpu.dimension_semantics<parallel>, #tpu.dimension_semantics<parallel>], iteration_bounds = array<i64: 2, 1>, scalar_prefetch = 0 : i64, scratch_operands = 1 : i64, tpu.core_type = #tpu.core_type<tc>, window_params = [{transform_indices = @transform_0, window_bounds = array<i64: 16, 1, 3, 128>}, {transform_indices = @transform_1, window_bounds = array<i64: 1, 1, 1, 16>}, {pipeline_mode = #tpu.pipeline_mode<synchronous>, transform_indices = @transform_2, window_bounds = array<i64: 128, 128>}, {pipeline_mode = #tpu.pipeline_mode<synchronous>, transform_indices = @transform_3, window_bounds = array<i64: 1, 128>}, {transform_indices = @transform_4, window_bounds = array<i64: 1, 4, 16, 16>}, {transform_indices = @transform_5, window_bounds = array<i64: 16, 128>}]} {
    %c16_i32 = arith.constant 16 : i32
    %0 = arith.muli %arg1, %c16_i32 : i32
    %1 = tpu.assume_multiple %0, 16 : i32
    %c0 = arith.constant 0 : index
    %c0_0 = arith.constant 0 : index
    %c0_1 = arith.constant 0 : index
    %c0_2 = arith.constant 0 : index
    %2 = vector.load %arg3[%c0, %c0_0, %c0_1, %c0_2] : memref<1x1x1x16xf32, #tpu.memory_space<vmem>>, vector<1x1x1x16xf32>
    %3 = vector.shape_cast %2 : vector<1x1x1x16xf32> to vector<1x16xf32>
    %4 = vector.shape_cast %3 : vector<1x16xf32> to vector<1x16xf32>
    %5 = vector.broadcast %4 : vector<1x16xf32> to vector<16x16xf32>
    %6 = arith.index_cast %1 : i32 to index
    %c0_3 = arith.constant 0 : index
    %c0_4 = arith.constant 0 : index
    %c0_5 = arith.constant 0 : index
    %7 = vector.load %arg2[%6, %c0_3, %c0_4, %c0_5] : memref<16x1x3x128xf32, #tpu.memory_space<vmem>>, vector<16x1x1x32xf32>
    %8 = vector.shape_cast %7 : vector<16x1x1x32xf32> to vector<16x32xf32>
    %cst = arith.constant 0.176776692 : f32
    %9 = vector.broadcast %cst : f32 to vector<16x32xf32>
    %10 = arith.mulf %8, %9 : vector<16x32xf32>
    %c0_6 = arith.constant 0 : index
    %c0_7 = arith.constant 0 : index
    %c1 = arith.constant 1 : index
    %c0_8 = arith.constant 0 : index
    %11 = vector.load %arg2[%c0_6, %c0_7, %c1, %c0_8] : memref<16x1x3x128xf32, #tpu.memory_space<vmem>>, vector<16x1x1x32xf32>
    %12 = vector.shape_cast %11 : vector<16x1x1x32xf32> to vector<16x32xf32>
    %c0_9 = arith.constant 0 : index
    %c0_10 = arith.constant 0 : index
    %c2 = arith.constant 2 : index
    %c0_11 = arith.constant 0 : index
    %13 = vector.load %arg2[%c0_9, %c0_10, %c2, %c0_11] : memref<16x1x3x128xf32, #tpu.memory_space<vmem>>, vector<16x1x1x32xf32>
    %14 = vector.shape_cast %13 : vector<16x1x1x32xf32> to vector<16x32xf32>
    %cst_12 = arith.constant dense<0.000000e+00> : vector<16x16xf32>
    %15 = tpu.matmul %10, %12, %cst_12 {dimension_numbers = #tpu.dot_dimension_numbers<[1], [1], [0], [0], [0, 0, 1, 0], [], []>} : vector<16x32xf32>, vector<16x32xf32>, vector<16x16xf32> -> vector<16x16xf32>
    %c0_13 = arith.constant 0 : index
    %c0_14 = arith.constant 0 : index
    %c0_15 = arith.constant 0 : index
    %c0_16 = arith.constant 0 : index
    %16 = vector.load %arg6[%c0_13, %c0_14, %c0_15, %c0_16] : memref<1x4x16x16xf32, #tpu.memory_space<vmem>>, vector<1x1x16x16xf32>
    %17 = vector.shape_cast %16 : vector<1x1x16x16xf32> to vector<16x16xf32>
    %18 = vector.shape_cast %15 : vector<16x16xf32> to vector<1x1x16x16xf32>
    tpu.vector_store %arg6[%c0_13, %c0_14, %c0_15, %c0_16], %18 {strides = array<i32>} : memref<1x4x16x16xf32, #tpu.memory_space<vmem>>, vector<1x1x16x16xf32>,
    %19 = arith.addf %15, %5 : vector<16x16xf32>
    %cst_17 = arith.constant dense<0xFF800000> : vector<16xf32>
    %20 = vector.multi_reduction <maximumf>, %19, %cst_17 [1] : vector<16x16xf32> to vector<16xf32>
    %21 = vector.shape_cast %20 : vector<16xf32> to vector<16x1xf32>
    %22 = vector.broadcast %21 : vector<16x1xf32> to vector<16x16xf32>
    %23 = arith.subf %19, %22 : vector<16x16xf32>
    %24 = math.exp %23 : vector<16x16xf32>
    %cst_18 = arith.constant dense<0.000000e+00> : vector<16xf32>
    %25 = vector.multi_reduction <add>, %24, %cst_18 [1] : vector<16x16xf32> to vector<16xf32>
    %26 = vector.shape_cast %25 : vector<16xf32> to vector<16x1xf32>
    %cst_19 = arith.constant 1.000000e+00 : f32
    %27 = vector.broadcast %cst_19 : f32 to vector<16x1xf32>
    %28 = arith.divf %27, %26 : vector<16x1xf32>
    %29 = vector.broadcast %28 : vector<16x1xf32> to vector<16x16xf32>
    %30 = arith.mulf %24, %29 : vector<16x16xf32>
    %cst_20 = arith.constant dense<0.000000e+00> : vector<16x32xf32>
    %31 = tpu.matmul %30, %14, %cst_20 {dimension_numbers = #tpu.dot_dimension_numbers<[1], [0], [0], [1], [0, 0, 1, 1], [], []>} : vector<16x16xf32>, vector<16x32xf32>, vector<16x32xf32> -> vector<16x32xf32>
    %c0_21 = arith.constant 0 : index
    %c0_22 = arith.constant 0 : index
    %32 = vector.load %arg8[%c0_21, %c0_22] : memref<16x128xf32, #tpu.memory_space<vmem>>, vector<16x32xf32>
    tpu.vector_store %arg8[%c0_21, %c0_22], %31 {strides = array<i32>} : memref<16x128xf32, #tpu.memory_space<vmem>>, vector<16x32xf32>,
    %33 = arith.index_cast %1 : i32 to index
    %c0_23 = arith.constant 0 : index
    %c0_24 = arith.constant 0 : index
    %c32 = arith.constant 32 : index
    %34 = vector.load %arg2[%33, %c0_23, %c0_24, %c32] : memref<16x1x3x128xf32, #tpu.memory_space<vmem>>, vector<16x1x1x32xf32>
    %35 = vector.shape_cast %34 : vector<16x1x1x32xf32> to vector<16x32xf32>
    %cst_25 = arith.constant 0.176776692 : f32
    %36 = vector.broadcast %cst_25 : f32 to vector<16x32xf32>
    %37 = arith.mulf %35, %36 : vector<16x32xf32>
    %c0_26 = arith.constant 0 : index
    %c0_27 = arith.constant 0 : index
    %c1_28 = arith.constant 1 : index
    %c32_29 = arith.constant 32 : index
    %38 = vector.load %arg2[%c0_26, %c0_27, %c1_28, %c32_29] : memref<16x1x3x128xf32, #tpu.memory_space<vmem>>, vector<16x1x1x32xf32>
    %39 = vector.shape_cast %38 : vector<16x1x1x32xf32> to vector<16x32xf32>
    %c0_30 = arith.constant 0 : index
    %c0_31 = arith.constant 0 : index
    %c2_32 = arith.constant 2 : index
    %c32_33 = arith.constant 32 : index
    %40 = vector.load %arg2[%c0_30, %c0_31, %c2_32, %c32_33] : memref<16x1x3x128xf32, #tpu.memory_space<vmem>>, vector<16x1x1x32xf32>
    %41 = vector.shape_cast %40 : vector<16x1x1x32xf32> to vector<16x32xf32>
    %cst_34 = arith.constant dense<0.000000e+00> : vector<16x16xf32>
    %42 = tpu.matmul %37, %39, %cst_34 {dimension_numbers = #tpu.dot_dimension_numbers<[1], [1], [0], [0], [0, 0, 1, 0], [], []>} : vector<16x32xf32>, vector<16x32xf32>, vector<16x16xf32> -> vector<16x16xf32>
    %c0_35 = arith.constant 0 : index
    %c1_36 = arith.constant 1 : index
    %c0_37 = arith.constant 0 : index
    %c0_38 = arith.constant 0 : index
    %43 = vector.load %arg6[%c0_35, %c1_36, %c0_37, %c0_38] : memref<1x4x16x16xf32, #tpu.memory_space<vmem>>, vector<1x1x16x16xf32>
    %44 = vector.shape_cast %43 : vector<1x1x16x16xf32> to vector<16x16xf32>
    %45 = vector.shape_cast %42 : vector<16x16xf32> to vector<1x1x16x16xf32>
    tpu.vector_store %arg6[%c0_35, %c1_36, %c0_37, %c0_38], %45 {strides = array<i32>} : memref<1x4x16x16xf32, #tpu.memory_space<vmem>>, vector<1x1x16x16xf32>,
    %46 = arith.addf %42, %5 : vector<16x16xf32>
    %cst_39 = arith.constant dense<0xFF800000> : vector<16xf32>
    %47 = vector.multi_reduction <maximumf>, %46, %cst_39 [1] : vector<16x16xf32> to vector<16xf32>
    %48 = vector.shape_cast %47 : vector<16xf32> to vector<16x1xf32>
    %49 = vector.broadcast %48 : vector<16x1xf32> to vector<16x16xf32>
    %50 = arith.subf %46, %49 : vector<16x16xf32>
    %51 = math.exp %50 : vector<16x16xf32>
    %cst_40 = arith.constant dense<0.000000e+00> : vector<16xf32>
    %52 = vector.multi_reduction <add>, %51, %cst_40 [1] : vector<16x16xf32> to vector<16xf32>
    %53 = vector.shape_cast %52 : vector<16xf32> to vector<16x1xf32>
    %cst_41 = arith.constant 1.000000e+00 : f32
    %54 = vector.broadcast %cst_41 : f32 to vector<16x1xf32>
    %55 = arith.divf %54, %53 : vector<16x1xf32>
    %56 = vector.broadcast %55 : vector<16x1xf32> to vector<16x16xf32>
    %57 = arith.mulf %51, %56 : vector<16x16xf32>
    %cst_42 = arith.constant dense<0.000000e+00> : vector<16x32xf32>
    %58 = tpu.matmul %57, %41, %cst_42 {dimension_numbers = #tpu.dot_dimension_numbers<[1], [0], [0], [1], [0, 0, 1, 1], [], []>} : vector<16x16xf32>, vector<16x32xf32>, vector<16x32xf32> -> vector<16x32xf32>
    %c0_43 = arith.constant 0 : index
    %c32_44 = arith.constant 32 : index
    %59 = vector.load %arg8[%c0_43, %c32_44] : memref<16x128xf32, #tpu.memory_space<vmem>>, vector<16x32xf32>
    tpu.vector_store %arg8[%c0_43, %c32_44], %58 {strides = array<i32>} : memref<16x128xf32, #tpu.memory_space<vmem>>, vector<16x32xf32>,
    %60 = arith.index_cast %1 : i32 to index
    %c0_45 = arith.constant 0 : index
    %c0_46 = arith.constant 0 : index
    %c64 = arith.constant 64 : index
    %61 = vector.load %arg2[%60, %c0_45, %c0_46, %c64] : memref<16x1x3x128xf32, #tpu.memory_space<vmem>>, vector<16x1x1x32xf32>
    %62 = vector.shape_cast %61 : vector<16x1x1x32xf32> to vector<16x32xf32>
    %cst_47 = arith.constant 0.176776692 : f32
    %63 = vector.broadcast %cst_47 : f32 to vector<16x32xf32>
    %64 = arith.mulf %62, %63 : vector<16x32xf32>
    %c0_48 = arith.constant 0 : index
    %c0_49 = arith.constant 0 : index
    %c1_50 = arith.constant 1 : index
    %c64_51 = arith.constant 64 : index
    %65 = vector.load %arg2[%c0_48, %c0_49, %c1_50, %c64_51] : memref<16x1x3x128xf32, #tpu.memory_space<vmem>>, vector<16x1x1x32xf32>
    %66 = vector.shape_cast %65 : vector<16x1x1x32xf32> to vector<16x32xf32>
    %c0_52 = arith.constant 0 : index
    %c0_53 = arith.constant 0 : index
    %c2_54 = arith.constant 2 : index
    %c64_55 = arith.constant 64 : index
    %67 = vector.load %arg2[%c0_52, %c0_53, %c2_54, %c64_55] : memref<16x1x3x128xf32, #tpu.memory_space<vmem>>, vector<16x1x1x32xf32>
    %68 = vector.shape_cast %67 : vector<16x1x1x32xf32> to vector<16x32xf32>
    %cst_56 = arith.constant dense<0.000000e+00> : vector<16x16xf32>
    %69 = tpu.matmul %64, %66, %cst_56 {dimension_numbers = #tpu.dot_dimension_numbers<[1], [1], [0], [0], [0, 0, 1, 0], [], []>} : vector<16x32xf32>, vector<16x32xf32>, vector<16x16xf32> -> vector<16x16xf32>
    %c0_57 = arith.constant 0 : index
    %c2_58 = arith.constant 2 : index
    %c0_59 = arith.constant 0 : index
    %c0_60 = arith.constant 0 : index
    %70 = vector.load %arg6[%c0_57, %c2_58, %c0_59, %c0_60] : memref<1x4x16x16xf32, #tpu.memory_space<vmem>>, vector<1x1x16x16xf32>
    %71 = vector.shape_cast %70 : vector<1x1x16x16xf32> to vector<16x16xf32>
    %72 = vector.shape_cast %69 : vector<16x16xf32> to vector<1x1x16x16xf32>
    tpu.vector_store %arg6[%c0_57, %c2_58, %c0_59, %c0_60], %72 {strides = array<i32>} : memref<1x4x16x16xf32, #tpu.memory_space<vmem>>, vector<1x1x16x16xf32>,
    %73 = arith.addf %69, %5 : vector<16x16xf32>
    %cst_61 = arith.constant dense<0xFF800000> : vector<16xf32>
    %74 = vector.multi_reduction <maximumf>, %73, %cst_61 [1] : vector<16x16xf32> to vector<16xf32>
    %75 = vector.shape_cast %74 : vector<16xf32> to vector<16x1xf32>
    %76 = vector.broadcast %75 : vector<16x1xf32> to vector<16x16xf32>
    %77 = arith.subf %73, %76 : vector<16x16xf32>
    %78 = math.exp %77 : vector<16x16xf32>
    %cst_62 = arith.constant dense<0.000000e+00> : vector<16xf32>
    %79 = vector.multi_reduction <add>, %78, %cst_62 [1] : vector<16x16xf32> to vector<16xf32>
    %80 = vector.shape_cast %79 : vector<16xf32> to vector<16x1xf32>
    %cst_63 = arith.constant 1.000000e+00 : f32
    %81 = vector.broadcast %cst_63 : f32 to vector<16x1xf32>
    %82 = arith.divf %81, %80 : vector<16x1xf32>
    %83 = vector.broadcast %82 : vector<16x1xf32> to vector<16x16xf32>
    %84 = arith.mulf %78, %83 : vector<16x16xf32>
    %cst_64 = arith.constant dense<0.000000e+00> : vector<16x32xf32>
    %85 = tpu.matmul %84, %68, %cst_64 {dimension_numbers = #tpu.dot_dimension_numbers<[1], [0], [0], [1], [0, 0, 1, 1], [], []>} : vector<16x16xf32>, vector<16x32xf32>, vector<16x32xf32> -> vector<16x32xf32>
    %c0_65 = arith.constant 0 : index
    %c64_66 = arith.constant 64 : index
    %86 = vector.load %arg8[%c0_65, %c64_66] : memref<16x128xf32, #tpu.memory_space<vmem>>, vector<16x32xf32>
    tpu.vector_store %arg8[%c0_65, %c64_66], %85 {strides = array<i32>} : memref<16x128xf32, #tpu.memory_space<vmem>>, vector<16x32xf32>,
    %87 = arith.index_cast %1 : i32 to index
    %c0_67 = arith.constant 0 : index
    %c0_68 = arith.constant 0 : index
    %c96 = arith.constant 96 : index
    %88 = vector.load %arg2[%87, %c0_67, %c0_68, %c96] : memref<16x1x3x128xf32, #tpu.memory_space<vmem>>, vector<16x1x1x32xf32>
    %89 = vector.shape_cast %88 : vector<16x1x1x32xf32> to vector<16x32xf32>
    %cst_69 = arith.constant 0.176776692 : f32
    %90 = vector.broadcast %cst_69 : f32 to vector<16x32xf32>
    %91 = arith.mulf %89, %90 : vector<16x32xf32>
    %c0_70 = arith.constant 0 : index
    %c0_71 = arith.constant 0 : index
    %c1_72 = arith.constant 1 : index
    %c96_73 = arith.constant 96 : index
    %92 = vector.load %arg2[%c0_70, %c0_71, %c1_72, %c96_73] : memref<16x1x3x128xf32, #tpu.memory_space<vmem>>, vector<16x1x1x32xf32>
    %93 = vector.shape_cast %92 : vector<16x1x1x32xf32> to vector<16x32xf32>
    %c0_74 = arith.constant 0 : index
    %c0_75 = arith.constant 0 : index
    %c2_76 = arith.constant 2 : index
    %c96_77 = arith.constant 96 : index
    %94 = vector.load %arg2[%c0_74, %c0_75, %c2_76, %c96_77] : memref<16x1x3x128xf32, #tpu.memory_space<vmem>>, vector<16x1x1x32xf32>
    %95 = vector.shape_cast %94 : vector<16x1x1x32xf32> to vector<16x32xf32>
    %cst_78 = arith.constant dense<0.000000e+00> : vector<16x16xf32>
    %96 = tpu.matmul %91, %93, %cst_78 {dimension_numbers = #tpu.dot_dimension_numbers<[1], [1], [0], [0], [0, 0, 1, 0], [], []>} : vector<16x32xf32>, vector<16x32xf32>, vector<16x16xf32> -> vector<16x16xf32>
    %c0_79 = arith.constant 0 : index
    %c3 = arith.constant 3 : index
    %c0_80 = arith.constant 0 : index
    %c0_81 = arith.constant 0 : index
    %97 = vector.load %arg6[%c0_79, %c3, %c0_80, %c0_81] : memref<1x4x16x16xf32, #tpu.memory_space<vmem>>, vector<1x1x16x16xf32>
    %98 = vector.shape_cast %97 : vector<1x1x16x16xf32> to vector<16x16xf32>
    %99 = vector.shape_cast %96 : vector<16x16xf32> to vector<1x1x16x16xf32>
    tpu.vector_store %arg6[%c0_79, %c3, %c0_80, %c0_81], %99 {strides = array<i32>} : memref<1x4x16x16xf32, #tpu.memory_space<vmem>>, vector<1x1x16x16xf32>,
    %100 = arith.addf %96, %5 : vector<16x16xf32>
    %cst_82 = arith.constant dense<0xFF800000> : vector<16xf32>
    %101 = vector.multi_reduction <maximumf>, %100, %cst_82 [1] : vector<16x16xf32> to vector<16xf32>
    %102 = vector.shape_cast %101 : vector<16xf32> to vector<16x1xf32>
    %103 = vector.broadcast %102 : vector<16x1xf32> to vector<16x16xf32>
    %104 = arith.subf %100, %103 : vector<16x16xf32>
    %105 = math.exp %104 : vector<16x16xf32>
    %cst_83 = arith.constant dense<0.000000e+00> : vector<16xf32>
    %106 = vector.multi_reduction <add>, %105, %cst_83 [1] : vector<16x16xf32> to vector<16xf32>
    %107 = vector.shape_cast %106 : vector<16xf32> to vector<16x1xf32>
    %cst_84 = arith.constant 1.000000e+00 : f32
    %108 = vector.broadcast %cst_84 : f32 to vector<16x1xf32>
    %109 = arith.divf %108, %107 : vector<16x1xf32>
    %110 = vector.broadcast %109 : vector<16x1xf32> to vector<16x16xf32>
    %111 = arith.mulf %105, %110 : vector<16x16xf32>
    %cst_85 = arith.constant dense<0.000000e+00> : vector<16x32xf32>
    %112 = tpu.matmul %111, %95, %cst_85 {dimension_numbers = #tpu.dot_dimension_numbers<[1], [0], [0], [1], [0, 0, 1, 1], [], []>} : vector<16x16xf32>, vector<16x32xf32>, vector<16x32xf32> -> vector<16x32xf32>
    %c0_86 = arith.constant 0 : index
    %c96_87 = arith.constant 96 : index
    %113 = vector.load %arg8[%c0_86, %c96_87] : memref<16x128xf32, #tpu.memory_space<vmem>>, vector<16x32xf32>
    tpu.vector_store %arg8[%c0_86, %c96_87], %112 {strides = array<i32>} : memref<16x128xf32, #tpu.memory_space<vmem>>, vector<16x32xf32>,
    %c0_88 = arith.constant 0 : index
    %c0_89 = arith.constant 0 : index
    %114 = vector.load %arg8[%c0_88, %c0_89] : memref<16x128xf32, #tpu.memory_space<vmem>>, vector<16x128xf32>
    %c0_90 = arith.constant 0 : index
    %c0_91 = arith.constant 0 : index
    %115 = vector.load %arg4[%c0_90, %c0_91] : memref<128x128xf32, #tpu.memory_space<vmem>>, vector<128x128xf32>
    %cst_92 = arith.constant dense<0.000000e+00> : vector<16x128xf32>
    %116 = tpu.matmul %114, %115, %cst_92 {dimension_numbers = #tpu.dot_dimension_numbers<[1], [0], [0], [1], [0, 0, 1, 1], [], []>} : vector<16x128xf32>, vector<128x128xf32>, vector<16x128xf32> -> vector<16x128xf32>
    %c0_93 = arith.constant 0 : index
    %c0_94 = arith.constant 0 : index
    %117 = vector.load %arg5[%c0_93, %c0_94] : memref<1x128xf32, #tpu.memory_space<vmem>>, vector<1x128xf32>
    %118 = vector.broadcast %117 : vector<1x128xf32> to vector<16x128xf32>
    %119 = arith.addf %116, %118 : vector<16x128xf32>
    %c0_95 = arith.constant 0 : index
    %c0_96 = arith.constant 0 : index
    %120 = vector.load %arg7[%c0_95, %c0_96] : memref<16x128xf32, #tpu.memory_space<vmem>>, vector<16x128xf32>
    tpu.vector_store %arg7[%c0_95, %c0_96], %119 {strides = array<i32>} : memref<16x128xf32, #tpu.memory_space<vmem>>, vector<16x128xf32>,
    return
  }
  func.func @transform_0(%arg0: i32, %arg1: i32) -> (i32, i32, i32, i32) {
    %c0_i32 = arith.constant 0 : i32
    %c0_i32_0 = arith.constant 0 : i32
    %c0_i32_1 = arith.constant 0 : i32
    %c0_i32_2 = arith.constant 0 : i32
    return %c0_i32, %arg0, %c0_i32_0, %c0_i32_1 : i32, i32, i32, i32
  }
  func.func @transform_1(%arg0: i32, %arg1: i32) -> (i32, i32, i32, i32) {
    %c0_i32 = arith.constant 0 : i32
    %c0_i32_0 = arith.constant 0 : i32
    %c0_i32_1 = arith.constant 0 : i32
    %c0_i32_2 = arith.constant 0 : i32
    return %arg0, %c0_i32, %c0_i32_0, %c0_i32_1 : i32, i32, i32, i32
  }
  func.func @transform_2(%arg0: i32, %arg1: i32) -> (i32, i32) {
    %c0_i32 = arith.constant 0 : i32
    %c0_i32_0 = arith.constant 0 : i32
    %c0_i32_1 = arith.constant 0 : i32
    return %c0_i32, %c0_i32_0 : i32, i32
  }
  func.func @transform_3(%arg0: i32, %arg1: i32) -> (i32, i32) {
    %c0_i32 = arith.constant 0 : i32
    %c0_i32_0 = arith.constant 0 : i32
    %c0_i32_1 = arith.constant 0 : i32
    return %c0_i32, %c0_i32_0 : i32, i32
  }
  func.func @transform_4(%arg0: i32, %arg1: i32) -> (i32, i32, i32, i32) {
    %c0_i32 = arith.constant 0 : i32
    %c0_i32_0 = arith.constant 0 : i32
    %c0_i32_1 = arith.constant 0 : i32
    return %arg0, %c0_i32, %arg1, %c0_i32_0 : i32, i32, i32, i32
  }
  func.func @transform_5(%arg0: i32, %arg1: i32) -> (i32, i32) {
    %c0_i32 = arith.constant 0 : i32
    return %arg1, %arg0 : i32, i32
  }
}

</mosaic_0001>

<llo_original>
// kernel: _lambda_.2
$region0: #{_lambda_.2}
  #allocation0 [shape = 'u32[]', space=smem, size = 0x4, offset = 0x4, fixed_abs, tag = 'smem constant byte address 0x4 - core index']
  #allocation1 [shape = 'u32[144,128]{1,0:T(1,128)}', space=vmem, size = 0x12000, scoped, tag = 'internal scratch']
  #allocation2 [shape = 'f32[32,384]{1,0:T(8,128)}', space=vmem, size = 0xc000, scoped, tag = 'scratch operand']
  %s0 = inlined_call_operand.hbm [shape: f32[32,128], index: 0, kind: input, shape index: {}]
  %s1 = inlined_call_operand.hbm [shape: f32[128,384], index: 1, kind: input, shape index: {}]
  %s2 = inlined_call_operand.vmem [shape: f32[1,384], index: 2, kind: input, shape index: {}]
  %s3 = inlined_call_operand.vmem [shape: f32[32,384], index: 3, kind: output, shape index: {}]
  %s4 = sld [smem:[#allocation0]]
  $region38: #{_lambda_.2} parent=0
    _
  %s6 = ssub.s32 1, %s4
  %s7 = scalar_select 0, %s6, %s4
  $region1: #{_lambda_.2} parent=0
    #allocation3 [shape = 'u8[16384]{0}', space=vmem, size = 0x4000, scoped, tag = 'input window, operand 0, single buffered']
    #allocation4 [shape = 's32[1]{0}', space=sflag, size = 0x4, scoped, tag = 'scoped memory for _lambda_.2']
    #allocation5 [shape = 'u8[196608]{0}', space=vmem, size = 0x30000, scoped, tag = 'input window, operand 1, single buffered']
    #allocation6 [shape = 's32[1]{0}', space=sflag, size = 0x4, scoped, tag = 'scoped memory for _lambda_.2']
    %8 = vsyncpa [#allocation4], 0
    %9 = vsyncpa [#allocation6], 0
    // Predicated region
    $region2: #{_lambda_.2} parent=1 // pred_check
      _
    $region3: #{_lambda_.2} parent=1 // pred_check_branch
      %11 = sbr.rel (0) target = $region5
    $region4: #{_lambda_.2} parent=1 // pred_region
      %s13 = ssub.s32 512, 512
      %14 = vsyncadd [#allocation4], %s13
      %s15 = sshll.u32 [#allocation3], 4
      %s16 = int_to_ptr.vmem [resolvable:$true] %s15
      %21 = dma.hbm_to_vmem [thread:$0]  %s0, 512, %s16, [#allocation4], 128, 128, 8
    $region5: #{_lambda_.2} parent=1 // pred_fallthru
      _
    // Predicated region
    $region6: #{_lambda_.2} parent=1 // pred_check
      _
    $region7: #{_lambda_.2} parent=1 // pred_check_branch
      %23 = sbr.rel (0) target = $region9
    $region8: #{_lambda_.2} parent=1 // pred_region
      %s25 = ssub.s32 6144, 6144
      %26 = vsyncadd [#allocation6], %s25
      %s27 = sshll.u32 [#allocation5], 4
      %s28 = int_to_ptr.vmem [resolvable:$true] %s27
      %33 = dma.hbm_to_vmem [thread:$0]  %s1, 6144, %s28, [#allocation6], 384, 384, 24
    $region9: #{_lambda_.2} parent=1 // pred_fallthru
      _
    // Predicated region
    $region10: #{_lambda_.2} parent=1 // pred_check
      _
    $region11: #{_lambda_.2} parent=1 // pred_check_branch
      %35 = sbr.rel (0) target = $region13
    $region12: #{_lambda_.2} parent=1 // pred_region
      _
    $region13: #{_lambda_.2} parent=1 // pred_fallthru
      _
    // Predicated region
    $region14: #{_lambda_.2} parent=1 // pred_check
      _
    $region15: #{_lambda_.2} parent=1 // pred_check_branch
      %37 = sbr.rel (0) target = $region17
    $region16: #{_lambda_.2} parent=1 // pred_region
      %38 = dma.done [#allocation4], 512
    $region17: #{_lambda_.2} parent=1 // pred_fallthru
      _
    // Predicated region
    $region18: #{_lambda_.2} parent=1 // pred_check
      _
    $region19: #{_lambda_.2} parent=1 // pred_check_branch
      %40 = sbr.rel (0) target = $region21
    $region20: #{_lambda_.2} parent=1 // pred_region
      %41 = dma.done [#allocation6], 6144
    $region21: #{_lambda_.2} parent=1 // pred_fallthru
      _
    %p42 = scmp.eq.s32.totalorder 0, 0
    // Predicated region
    $region22: #{_lambda_.2} parent=1 // pred_check
      %p43 = pneg %p42
    $region23: #{_lambda_.2} parent=1 // pred_check_branch
      %45 = sbr.rel (%p43) target = $region25
    $region24: #{_lambda_.2} parent=1 // pred_region
      %46 = vst [vmem:[#allocation2] sm:$0xff] 0.0
      %47 = vst [vmem:[#allocation2 + $0x8] sm:$0xff] 0.0
      %48 = vst [vmem:[#allocation2 + $0x10] sm:$0xff] 0.0
      %49 = vst [vmem:[#allocation2 + $0x18] sm:$0xff] 0.0
      %50 = vst [vmem:[#allocation2 + $0x20] sm:$0xff] 0.0
      %51 = vst [vmem:[#allocation2 + $0x28] sm:$0xff] 0.0
      %52 = vst [vmem:[#allocation2 + $0x30] sm:$0xff] 0.0
      %53 = vst [vmem:[#allocation2 + $0x38] sm:$0xff] 0.0
      %54 = vst [vmem:[#allocation2 + $0x40] sm:$0xff] 0.0
      %55 = vst [vmem:[#allocation2 + $0x48] sm:$0xff] 0.0
      %56 = vst [vmem:[#allocation2 + $0x50] sm:$0xff] 0.0
      %57 = vst [vmem:[#allocation2 + $0x58] sm:$0xff] 0.0
    $region25: #{_lambda_.2} parent=1 // pred_fallthru
      _
    %v58 = vld [vmem:[#allocation2] sm:$0xff]
    %v59 = vld [vmem:[#allocation2 + $0x8] sm:$0xff]
    %v60 = vld [vmem:[#allocation2 + $0x10] sm:$0xff]
    %v61 = vld [vmem:[#allocation2 + $0x18] sm:$0xff]
    %v62 = vld [vmem:[#allocation2 + $0x20] sm:$0xff]
    %v63 = vld [vmem:[#allocation2 + $0x28] sm:$0xff]
    %v64 = vld [vmem:[#allocation2 + $0x30] sm:$0xff]
    %v65 = vld [vmem:[#allocation2 + $0x38] sm:$0xff]
    %v66 = vld [vmem:[#allocation2 + $0x40] sm:$0xff]
    %v67 = vld [vmem:[#allocation2 + $0x48] sm:$0xff]
    %v68 = vld [vmem:[#allocation2 + $0x50] sm:$0xff]
    %v69 = vld [vmem:[#allocation2 + $0x58] sm:$0xff]
    %v70 = vld [vmem:[#allocation3] sm:$0xff]
    %v71 = vld [vmem:[#allocation3 + $0x8] sm:$0xff]
    %v72 = vld [vmem:[#allocation3 + $0x10] sm:$0xff]
    %v73 = vld [vmem:[#allocation3 + $0x18] sm:$0xff]
    %v74 = vld [vmem:[#allocation5] sm:$0xff]
    %v75 = vld [vmem:[#allocation5 + $0x8] sm:$0xff]
    %v76 = vld [vmem:[#allocation5 + $0x10] sm:$0xff]
    %v77 = vld [vmem:[#allocation5 + $0x18] sm:$0xff]
    %v78 = vld [vmem:[#allocation5 + $0x20] sm:$0xff]
    %v79 = vld [vmem:[#allocation5 + $0x28] sm:$0xff]
    %v80 = vld [vmem:[#allocation5 + $0x30] sm:$0xff]
    %v81 = vld [vmem:[#allocation5 + $0x38] sm:$0xff]
    %v82 = vld [vmem:[#allocation5 + $0x40] sm:$0xff]
    %v83 = vld [vmem:[#allocation5 + $0x48] sm:$0xff]
    %v84 = vld [vmem:[#allocation5 + $0x50] sm:$0xff]
    %v85 = vld [vmem:[#allocation5 + $0x58] sm:$0xff]
    %v86 = vld [vmem:[#allocation5 + $0x60] sm:$0xff]
    %v87 = vld [vmem:[#allocation5 + $0x68] sm:$0xff]
    %v88 = vld [vmem:[#allocation5 + $0x70] sm:$0xff]
    %v89 = vld [vmem:[#allocation5 + $0x78] sm:$0xff]
    %v90 = vld [vmem:[#allocation5 + $0x80] sm:$0xff]
    %v91 = vld [vmem:[#allocation5 + $0x88] sm:$0xff]
    %v92 = vld [vmem:[#allocation5 + $0x90] sm:$0xff]
    %v93 = vld [vmem:[#allocation5 + $0x98] sm:$0xff]
    %v94 = vld [vmem:[#allocation5 + $0xa0] sm:$0xff]
    %v95 = vld [vmem:[#allocation5 + $0xa8] sm:$0xff]
    %v96 = vld [vmem:[#allocation5 + $0xb0] sm:$0xff]
    %v97 = vld [vmem:[#allocation5 + $0xb8] sm:$0xff]
    %v98 = vld [vmem:[#allocation5 + $0xc0] sm:$0xff]
    %v99 = vld [vmem:[#allocation5 + $0xc8] sm:$0xff]
    %v100 = vld [vmem:[#allocation5 + $0xd0] sm:$0xff]
    %v101 = vld [vmem:[#allocation5 + $0xd8] sm:$0xff]
    %v102 = vld [vmem:[#allocation5 + $0xe0] sm:$0xff]
    %v103 = vld [vmem:[#allocation5 + $0xe8] sm:$0xff]
    %v104 = vld [vmem:[#allocation5 + $0xf0] sm:$0xff]
    %v105 = vld [vmem:[#allocation5 + $0xf8] sm:$0xff]
    %v106 = vld [vmem:[#allocation5 + $0x100] sm:$0xff]
    %v107 = vld [vmem:[#allocation5 + $0x108] sm:$0xff]
    %v108 = vld [vmem:[#allocation5 + $0x110] sm:$0xff]
    %v109 = vld [vmem:[#allocation5 + $0x118] sm:$0xff]
    %v110 = vld [vmem:[#allocation5 + $0x120] sm:$0xff]
    %v111 = vld [vmem:[#allocation5 + $0x128] sm:$0xff]
    %v112 = vld [vmem:[#allocation5 + $0x130] sm:$0xff]
    %v113 = vld [vmem:[#allocation5 + $0x138] sm:$0xff]
    %v114 = vld [vmem:[#allocation5 + $0x140] sm:$0xff]
    %v115 = vld [vmem:[#allocation5 + $0x148] sm:$0xff]
    %v116 = vld [vmem:[#allocation5 + $0x150] sm:$0xff]
    %v117 = vld [vmem:[#allocation5 + $0x158] sm:$0xff]
    %v118 = vld [vmem:[#allocation5 + $0x160] sm:$0xff]
    %v119 = vld [vmem:[#allocation5 + $0x168] sm:$0xff]
    %v120 = vld [vmem:[#allocation5 + $0x170] sm:$0xff]
    %v121 = vld [vmem:[#allocation5 + $0x178] sm:$0xff]
    %122 = vmatprep.subr.mxu0 %v75
    %123 = vmatpush1.msra.mxu0 %v74
    %124 = vmatprep.subr.mxu0 %v78
    %125 = vmatpush1.msra.mxu0 %v77
    %126 = vmatprep.subr.mxu0 %v81
    %127 = vmatpush1.msra.mxu0 %v80
    %128 = vmatprep.subr.mxu0 %v84
    %129 = vmatpush1.msra.mxu0 %v83
    %130 = vmatprep.subr.mxu0 %v87
    %131 = vmatpush1.msra.mxu0 %v86
    %132 = vmatprep.subr.mxu0 %v90
    %133 = vmatpush1.msra.mxu0 %v89
    %134 = vmatprep.subr.mxu0 %v93
    %135 = vmatpush1.msra.mxu0 %v92
    %136 = vmatprep.subr.mxu0 %v96
    %137 = vmatpush1.msra.mxu0 %v95
    %138 = vmatprep.subr.mxu0 %v99
    %139 = vmatpush1.msra.mxu0 %v98
    %140 = vmatprep.subr.mxu0 %v102
    %141 = vmatpush1.msra.mxu0 %v101
    %142 = vmatprep.subr.mxu0 %v105
    %143 = vmatpush1.msra.mxu0 %v104
    %144 = vmatprep.subr.mxu0 %v108
    %145 = vmatpush1.msra.mxu0 %v107
    %146 = vmatprep.subr.mxu0 %v111
    %147 = vmatpush1.msra.mxu0 %v110
    %148 = vmatprep.subr.mxu0 %v114
    %149 = vmatpush1.msra.mxu0 %v113
    %150 = vmatprep.subr.mxu0 %v117
    %151 = vmatpush1.msra.mxu0 %v116
    %152 = vmatprep.subr.mxu0 %v120
    %153 = vmatpush1.msra.mxu0 %v119
    %154 = vmatprep.subr.mxu0 0.0
    %155 = vmatpush1.msra.mxu0 0.0
    %156 = vmatprep.subr.mxu0 0.0
    %157 = vmatpush1.msra.mxu0 0.0
    %158 = vmatprep.subr.mxu0 0.0
    %159 = vmatpush1.msra.mxu0 0.0
    %160 = vmatprep.subr.mxu0 0.0
    %161 = vmatpush1.msra.mxu0 0.0
    %162 = vmatprep.subr.mxu0 0.0
    %163 = vmatpush1.msra.mxu0 0.0
    %164 = vmatprep.subr.mxu0 0.0
    %165 = vmatpush1.msra.mxu0 0.0
    %166 = vmatprep.subr.mxu0 0.0
    %167 = vmatpush1.msra.mxu0 0.0
    %168 = vmatprep.subr.mxu0 0.0
    %169 = vmatpush1.msra.mxu0 0.0
    %170 = vmatprep.subr.mxu0 0.0
    %171 = vmatpush1.msra.mxu0 0.0
    %172 = vmatprep.subr.mxu0 0.0
    %173 = vmatpush1.msra.mxu0 0.0
    %174 = vmatprep.subr.mxu0 0.0
    %175 = vmatpush1.msra.mxu0 0.0
    %176 = vmatprep.subr.mxu0 0.0
    %177 = vmatpush1.msra.mxu0 0.0
    %178 = vmatprep.subr.mxu0 0.0
    %179 = vmatpush1.msra.mxu0 0.0
    %180 = vmatprep.subr.mxu0 0.0
    %181 = vmatpush1.msra.mxu0 0.0
    %182 = vmatprep.subr.mxu0 0.0
    %183 = vmatpush1.msra.mxu0 0.0
    %184 = vmatprep.subr.mxu0 0.0
    %185 = vmatpush1.msra.mxu0 0.0
    %186 = vmatprep.mubr.f32.mxu0 0.0
    %187 = vmatmul.mubr.f32.gmra.mrb[0].mxu0 %v70
    %v188 = vpop.f32.mrb[0].mxu0
    %v189 = vadd.f32 0.0, %v188
    %v190 = vpop.f32.mrb[0].mxu0
    %v191 = vadd.f32 0.0, %v190
    %192 = vmatprep.mubr.f32.mxu0 0.0
    %193 = vmatmul.mubr.f32.gmra.mrb[0].mxu0 %v71
    %v194 = vpop.f32.mrb[0].mxu0
    %v195 = vadd.f32 0.0, %v194
    %v196 = vpop.f32.mrb[0].mxu0
    %v197 = vadd.f32 0.0, %v196
    %198 = vmatprep.mubr.f32.mxu0 0.0
    %199 = vmatmul.mubr.f32.gmra.mrb[0].mxu0 %v72
    %v200 = vpop.f32.mrb[0].mxu0
    %v201 = vadd.f32 0.0, %v200
    %v202 = vpop.f32.mrb[0].mxu0
    %v203 = vadd.f32 0.0, %v202
    %204 = vmatprep.mubr.f32.mxu0 0.0
    %205 = vmatmul.mubr.f32.gmra.mrb[0].mxu0 %v73
    %v206 = vpop.f32.mrb[0].mxu0
    %v207 = vadd.f32 0.0, %v206
    %v208 = vpop.f32.mrb[0].mxu0
    %v209 = vadd.f32 0.0, %v208
    %210 = vdwg.mxu0
    %211 = vmatprep.subr.mxu0 0.0
    %212 = vmatpush1.msra.mxu0 %v76
    %213 = vmatprep.subr.mxu0 0.0
    %214 = vmatpush1.msra.mxu0 %v79
    %215 = vmatprep.subr.mxu0 0.0
    %216 = vmatpush1.msra.mxu0 %v82
    %217 = vmatprep.subr.mxu0 0.0
    %218 = vmatpush1.msra.mxu0 %v85
    %219 = vmatprep.subr.mxu0 0.0
    %220 = vmatpush1.msra.mxu0 %v88
    %221 = vmatprep.subr.mxu0 0.0
    %222 = vmatpush1.msra.mxu0 %v91
    %223 = vmatprep.subr.mxu0 0.0
    %224 = vmatpush1.msra.mxu0 %v94
    %225 = vmatprep.subr.mxu0 0.0
    %226 = vmatpush1.msra.mxu0 %v97
    %227 = vmatprep.subr.mxu0 0.0
    %228 = vmatpush1.msra.mxu0 %v100
    %229 = vmatprep.subr.mxu0 0.0
    %230 = vmatpush1.msra.mxu0 %v103
    %231 = vmatprep.subr.mxu0 0.0
    %232 = vmatpush1.msra.mxu0 %v106
    %233 = vmatprep.subr.mxu0 0.0
    %234 = vmatpush1.msra.mxu0 %v109
    %235 = vmatprep.subr.mxu0 0.0
    %236 = vmatpush1.msra.mxu0 %v112
    %237 = vmatprep.subr.mxu0 0.0
    %238 = vmatpush1.msra.mxu0 %v115
    %239 = vmatprep.subr.mxu0 0.0
    %240 = vmatpush1.msra.mxu0 %v118
    %241 = vmatprep.subr.mxu0 0.0
    %242 = vmatpush1.msra.mxu0 %v121
    %243 = vmatprep.subr.mxu0 0.0
    %244 = vmatpush1.msra.mxu0 0.0
    %245 = vmatprep.subr.mxu0 0.0
    %246 = vmatpush1.msra.mxu0 0.0
    %247 = vmatprep.subr.mxu0 0.0
    %248 = vmatpush1.msra.mxu0 0.0
    %249 = vmatprep.subr.mxu0 0.0
    %250 = vmatpush1.msra.mxu0 0.0
    %251 = vmatprep.subr.mxu0 0.0
    %252 = vmatpush1.msra.mxu0 0.0
    %253 = vmatprep.subr.mxu0 0.0
    %254 = vmatpush1.msra.mxu0 0.0
    %255 = vmatprep.subr.mxu0 0.0
    %256 = vmatpush1.msra.mxu0 0.0
    %257 = vmatprep.subr.mxu0 0.0
    %258 = vmatpush1.msra.mxu0 0.0
    %259 = vmatprep.subr.mxu0 0.0
    %260 = vmatpush1.msra.mxu0 0.0
    %261 = vmatprep.subr.mxu0 0.0
    %262 = vmatpush1.msra.mxu0 0.0
    %263 = vmatprep.subr.mxu0 0.0
    %264 = vmatpush1.msra.mxu0 0.0
    %265 = vmatprep.subr.mxu0 0.0
    %266 = vmatpush1.msra.mxu0 0.0
    %267 = vmatprep.subr.mxu0 0.0
    %268 = vmatpush1.msra.mxu0 0.0
    %269 = vmatprep.subr.mxu0 0.0
    %270 = vmatpush1.msra.mxu0 0.0
    %271 = vmatprep.subr.mxu0 0.0
    %272 = vmatpush1.msra.mxu0 0.0
    %273 = vmatprep.subr.mxu0 0.0
    %274 = vmatpush1.msra.mxu0 0.0
    %275 = vmatprep.mubr.f32.mxu0 0.0
    %276 = vmatmul.mubr.f32.gmra.mrb[0].mxu0 %v70
    %v277 = vpop.f32.mrb[0].mxu0
    %v278 = vadd.f32 0.0, %v277
    %v279 = vpop.f32.mrb[0].mxu0
    %280 = vmatprep.mubr.f32.mxu0 0.0
    %281 = vmatmul.mubr.f32.gmra.mrb[0].mxu0 %v71
    %v282 = vpop.f32.mrb[0].mxu0
    %v283 = vadd.f32 0.0, %v282
    %v284 = vpop.f32.mrb[0].mxu0
    %285 = vmatprep.mubr.f32.mxu0 0.0
    %286 = vmatmul.mubr.f32.gmra.mrb[0].mxu0 %v72
    %v287 = vpop.f32.mrb[0].mxu0
    %v288 = vadd.f32 0.0, %v287
    %v289 = vpop.f32.mrb[0].mxu0
    %290 = vmatprep.mubr.f32.mxu0 0.0
    %291 = vmatmul.mubr.f32.gmra.mrb[0].mxu0 %v73
    %v292 = vpop.f32.mrb[0].mxu0
    %v293 = vadd.f32 0.0, %v292
    %v294 = vpop.f32.mrb[0].mxu0
    %295 = vdwg.mxu0
    %v296 = vadd.f32 %v58, %v189
    %v297 = vadd.f32 %v59, %v191
    %v298 = vadd.f32 %v60, %v278
    %v299 = vadd.f32 %v61, %v195
    %v300 = vadd.f32 %v62, %v197
    %v301 = vadd.f32 %v63, %v283
    %v302 = vadd.f32 %v64, %v201
    %v303 = vadd.f32 %v65, %v203
    %v304 = vadd.f32 %v66, %v288
    %v305 = vadd.f32 %v67, %v207
    %v306 = vadd.f32 %v68, %v209
    %v307 = vadd.f32 %v69, %v293
    %308 = vst [vmem:[#allocation2] sm:$0xff] %v296
    %309 = vst [vmem:[#allocation2 + $0x8] sm:$0xff] %v297
    %310 = vst [vmem:[#allocation2 + $0x10] sm:$0xff] %v298
    %311 = vst [vmem:[#allocation2 + $0x18] sm:$0xff] %v299
    %312 = vst [vmem:[#allocation2 + $0x20] sm:$0xff] %v300
    %313 = vst [vmem:[#allocation2 + $0x28] sm:$0xff] %v301
    %314 = vst [vmem:[#allocation2 + $0x30] sm:$0xff] %v302
    %315 = vst [vmem:[#allocation2 + $0x38] sm:$0xff] %v303
    %316 = vst [vmem:[#allocation2 + $0x40] sm:$0xff] %v304
    %317 = vst [vmem:[#allocation2 + $0x48] sm:$0xff] %v305
    %318 = vst [vmem:[#allocation2 + $0x50] sm:$0xff] %v306
    %319 = vst [vmem:[#allocation2 + $0x58] sm:$0xff] %v307
    // Predicated region
    $region26: #{_lambda_.2} parent=1 // pred_check
      %p320 = pneg %p42
    $region27: #{_lambda_.2} parent=1 // pred_check_branch
      %322 = sbr.rel (%p320) target = $region29
    $region28: #{_lambda_.2} parent=1 // pred_region
      %v323 = vld [vmem:[#allocation2] sm:$0xff]
      %v324 = vld [vmem:[#allocation2 + $0x8] sm:$0xff]
      %v325 = vld [vmem:[#allocation2 + $0x10] sm:$0xff]
      %v326 = vld [vmem:[#allocation2 + $0x18] sm:$0xff]
      %v327 = vld [vmem:[#allocation2 + $0x20] sm:$0xff]
      %v328 = vld [vmem:[#allocation2 + $0x28] sm:$0xff]
      %v329 = vld [vmem:[#allocation2 + $0x30] sm:$0xff]
      %v330 = vld [vmem:[#allocation2 + $0x38] sm:$0xff]
      %v331 = vld [vmem:[#allocation2 + $0x40] sm:$0xff]
      %v332 = vld [vmem:[#allocation2 + $0x48] sm:$0xff]
      %v333 = vld [vmem:[#allocation2 + $0x50] sm:$0xff]
      %v334 = vld [vmem:[#allocation2 + $0x58] sm:$0xff]
      %v335 = vld [vmem:[%s2] sm:$0x7]
      %v337 = vlaneseq
      %v338 = vshrl.u32 %v337, 7
      %v339 = vsub.s32 0, %v338
      %v340 = vrot.slane %v335, %v339
      %v341 = vlaneseq
      %v342 = vshrl.u32 %v341, 7
      %v343 = vsub.s32 1, %v342
      %v344 = vrot.slane %v335, %v343
      %v345 = vlaneseq
      %v346 = vshrl.u32 %v345, 7
      %v347 = vsub.s32 2, %v346
      %v348 = vrot.slane %v335, %v347
      %v352 = vadd.f32 %v323, %v340
      %v353 = vadd.f32 %v324, %v344
      %v354 = vadd.f32 %v325, %v348
      %v355 = vadd.f32 %v326, %v340
      %v356 = vadd.f32 %v327, %v344
      %v357 = vadd.f32 %v328, %v348
      %v358 = vadd.f32 %v329, %v340
      %v359 = vadd.f32 %v330, %v344
      %v360 = vadd.f32 %v331, %v348
      %v361 = vadd.f32 %v332, %v340
      %v362 = vadd.f32 %v333, %v344
      %v363 = vadd.f32 %v334, %v348
      %364 = vst [vmem:[%s3] sm:$0xff] %v352
      %365 = vst [vmem:[%s3 + $0x8] sm:$0xff] %v353
      %366 = vst [vmem:[%s3 + $0x10] sm:$0xff] %v354
      %367 = vst [vmem:[%s3 + $0x18] sm:$0xff] %v355
      %368 = vst [vmem:[%s3 + $0x20] sm:$0xff] %v356
      %369 = vst [vmem:[%s3 + $0x28] sm:$0xff] %v357
      %370 = vst [vmem:[%s3 + $0x30] sm:$0xff] %v358
      %371 = vst [vmem:[%s3 + $0x38] sm:$0xff] %v359
      %372 = vst [vmem:[%s3 + $0x40] sm:$0xff] %v360
      %373 = vst [vmem:[%s3 + $0x48] sm:$0xff] %v361
      %374 = vst [vmem:[%s3 + $0x50] sm:$0xff] %v362
      %375 = vst [vmem:[%s3 + $0x58] sm:$0xff] %v363
    $region29: #{_lambda_.2} parent=1 // pred_fallthru
      _
    // Predicated region
    $region30: #{_lambda_.2} parent=1 // pred_check
      _
    $region31: #{_lambda_.2} parent=1 // pred_check_branch
      %377 = sbr.rel (0) target = $region33
    $region32: #{_lambda_.2} parent=1 // pred_region
      _
    $region33: #{_lambda_.2} parent=1 // pred_fallthru
      _
    // Predicated region
    $region34: #{_lambda_.2} parent=1 // pred_check
      _
    $region35: #{_lambda_.2} parent=1 // pred_check_branch
      %379 = sbr.rel (0) target = $region37
    $region36: #{_lambda_.2} parent=1 // pred_region
      _
    $region37: #{_lambda_.2} parent=1 // pred_fallthru
      _
    %380 = vsyncpa [#allocation4], 1
    %381 = vsyncpa [#allocation6], 1

// kernel: _lambda_.3
$region0: #{_lambda_.3}
  #allocation0 [shape = 'u32[]', space=smem, size = 0x4, offset = 0x4, fixed_abs, tag = 'smem constant byte address 0x4 - core index']
  #allocation1 [shape = 'u32[144,128]{1,0:T(1,128)}', space=vmem, size = 0x12000, scoped, tag = 'internal scratch']
  #allocation2 [shape = 'f32[16,128]{1,0:T(8,128)}', space=vmem, size = 0x2000, scoped, tag = 'scratch operand']
  %s0 = inlined_call_operand.vmem [shape: f32[16,2,3,128], index: 0, kind: input, shape index: {}]
  %s1 = inlined_call_operand.vmem [shape: f32[2,1,1,16], index: 1, kind: input, shape index: {}]
  %s2 = inlined_call_operand.vmem [shape: f32[128,128], index: 2, kind: input, shape index: {}]
  %s3 = inlined_call_operand.vmem [shape: f32[1,128], index: 3, kind: input, shape index: {}]
  %s4 = inlined_call_operand.hbm [shape: f32[2,4,16,16], index: 4, kind: output, shape index: {0}]
  %s5 = inlined_call_operand.vmem [shape: f32[16,256], index: 5, kind: output, shape index: {1}]
  %6 = xla_tuple %s4, %s5
  %s7 = sld [smem:[#allocation0]]
  $region132: #{_lambda_.3} parent=0
    _
  %s9 = ssub.s32 1, %s7
  %s10 = scalar_select 0, %s9, %s7
  $region1: #{_lambda_.3} parent=0
    #allocation3 [shape = 'u8[65536]{0}', space=vmem, size = 0x10000, scoped, tag = 'input window, operand 0']
    #allocation4 [shape = 'u8[65536]{0}', space=vmem, size = 0x10000, scoped, tag = 'output window, operand 0']
    #allocation5 [shape = 's32[2]{0}', space=sflag, size = 0x8, scoped, tag = 'scoped memory for _lambda_.3']
    #allocation6 [shape = 'u8[16384]{0}', space=vmem, size = 0x4000, scoped, tag = 'output window, operand 1']
    %11 = vsyncpa [#allocation5], 0
    %s12 = scalar_lea.sflag [#allocation5], 1
    %13 = vsyncpa %s12, 0
    loop: start=0, step=1, limit=4
    $region2: #{_lambda_.3} parent=1 // loop_pre_header
      _
    $region3: #{_lambda_.3} parent=1 // loop_header
      %s15 = sphi 0, %s19
      %p16 = scmp.ge.s32.totalorder %s15, 4
      %s22 = sphi 0, %s34
      %s23 = sphi 0, %s30
      %s24 = sphi 0, %s22
      %s25 = sphi 0, %s23
      %s26 = sphi 0, %s24
      %s27 = sphi 0, %s25
      %s37 = sphi 0, %s39
      %s40 = sphi 0, %s37
      %s41 = sphi 0, %s40
      %s57 = sphi 0, %s41
      %s63 = sphi 0, %s65
      %s66 = sphi 0, %s63
      %s67 = sphi 0, %s66
      %s83 = sphi 0, %s67
      %s87 = sphi 0, %s87
      %s89 = sphi 0, %s87
      %s90 = sphi 0, %s89
      %s104 = sphi 0, %s90
      %s108 = sphi 0, %s108
      %s110 = sphi 0, %s108
      %s111 = sphi 0, %s110
      %s125 = sphi 0, %s111
      %s133 = sphi 0, %s135
      %s136 = sphi 0, %s133
      %s137 = sphi 0, %s136
      %s153 = sphi 0, %s137
      %s161 = sphi 0, %s163
      %s164 = sphi 0, %s161
      %s165 = sphi 0, %s164
      %s181 = sphi 0, %s165
    $region4: #{_lambda_.3} parent=1 // loop_header_branch
      %18 = sbr.rel (%p16) target = $region8
    $region5: #{_lambda_.3} parent=1 // loop_body
      %s20 = ssub.s32 %s15, 1
      %s21 = ssub.s32 %s15, 2
      %s28 = sadd.s32 1, %s23
      %p29 = scmp.ge.s32.totalorder %s28, 1
      %s30 = scalar_select %p29, 0, %s28
      %s31 = sadd.s32 1, %s22
      %s32 = scalar_select %p29, %s31, %s22
      %p33 = scmp.ge.s32.totalorder %s32, 2
      %s34 = scalar_select %p33, 0, %s32
      %s35 = ssub.s32 %s22, %s34
      %p36 = scmp.eq.s32.totalorder %s35, 0
      %s38 = sadd.s32 %s37, 1
      %s39 = scalar_select %p36, %s37, %s38
      %p42 = pneg %p36
      %p43 = scmp.eq.s32.totalorder %s15, 1
      %p44 = por %p42, %p43
      %p45 = scmp.ne.s32.totalorder %s37, %s40
      %p46 = scmp.eq.s32.totalorder %s15, 0
      %p47 = por %p45, %p46
      %p48 = scmp.ne.s32.totalorder %s37, %s40
      %p49 = scmp.eq.s32.totalorder %s20, 1
      %p50 = por %p48, %p49
      %p51 = scmp.ne.s32.totalorder %s40, %s41
      %p52 = scmp.eq.s32.totalorder %s20, 0
      %p53 = por %p51, %p52
      %p54 = scmp.ne.s32.totalorder %s40, %s41
      %p55 = scmp.eq.s32.totalorder %s21, 1
      %p56 = por %p54, %p55
      %p58 = scmp.ne.s32.totalorder %s41, %s57
      %p59 = scmp.eq.s32.totalorder %s21, 0
      %p60 = por %p58, %p59
      %s61 = ssub.s32 %s22, %s34
      %p62 = scmp.eq.s32.totalorder %s61, 0
      %s64 = sadd.s32 %s63, 1
      %s65 = scalar_select %p62, %s63, %s64
      %p68 = pneg %p62
      %p69 = scmp.eq.s32.totalorder %s15, 1
      %p70 = por %p68, %p69
      %p71 = scmp.ne.s32.totalorder %s63, %s66
      %p72 = scmp.eq.s32.totalorder %s15, 0
      %p73 = por %p71, %p72
      %p74 = scmp.ne.s32.totalorder %s63, %s66
      %p75 = scmp.eq.s32.totalorder %s20, 1
      %p76 = por %p74, %p75
      %p77 = scmp.ne.s32.totalorder %s66, %s67
      %p78 = scmp.eq.s32.totalorder %s20, 0
      %p79 = por %p77, %p78
      %p80 = scmp.ne.s32.totalorder %s66, %s67
      %p81 = scmp.eq.s32.totalorder %s21, 1
      %p82 = por %p80, %p81
      %p84 = scmp.ne.s32.totalorder %s67, %s83
      %p85 = scmp.eq.s32.totalorder %s21, 0
      %p86 = por %p84, %p85
      %s88 = sadd.s32 %s87, 1
      %p91 = scmp.eq.s32.totalorder %s15, 1
      %p92 = scmp.ne.s32.totalorder %s87, %s89
      %p93 = scmp.eq.s32.totalorder %s15, 0
      %p94 = por %p92, %p93
      %p95 = scmp.ne.s32.totalorder %s87, %s89
      %p96 = scmp.eq.s32.totalorder %s20, 1
      %p97 = por %p95, %p96
      %p98 = scmp.ne.s32.totalorder %s89, %s90
      %p99 = scmp.eq.s32.totalorder %s20, 0
      %p100 = por %p98, %p99
      %p101 = scmp.ne.s32.totalorder %s89, %s90
      %p102 = scmp.eq.s32.totalorder %s21, 1
      %p103 = por %p101, %p102
      %p105 = scmp.ne.s32.totalorder %s90, %s104
      %p106 = scmp.eq.s32.totalorder %s21, 0
      %p107 = por %p105, %p106
      %s109 = sadd.s32 %s108, 1
      %p112 = scmp.eq.s32.totalorder %s15, 1
      %p113 = scmp.ne.s32.totalorder %s108, %s110
      %p114 = scmp.eq.s32.totalorder %s15, 0
      %p115 = por %p113, %p114
      %p116 = scmp.ne.s32.totalorder %s108, %s110
      %p117 = scmp.eq.s32.totalorder %s20, 1
      %p118 = por %p116, %p117
      %p119 = scmp.ne.s32.totalorder %s110, %s111
      %p120 = scmp.eq.s32.totalorder %s20, 0
      %p121 = por %p119, %p120
      %p122 = scmp.ne.s32.totalorder %s110, %s111
      %p123 = scmp.eq.s32.totalorder %s21, 1
      %p124 = por %p122, %p123
      %p126 = scmp.ne.s32.totalorder %s111, %s125
      %p127 = scmp.eq.s32.totalorder %s21, 0
      %p128 = por %p126, %p127
      %s129 = ssub.s32 %s22, %s34
      %s130 = ssub.s32 %s23, %s30
      %s131 = sor.u32 %s129, %s130
      %p132 = scmp.eq.s32.totalorder %s131, 0
      %s134 = sadd.s32 %s133, 1
      %s135 = scalar_select %p132, %s133, %s134
      %p138 = pneg %p132
      %p139 = scmp.eq.s32.totalorder %s15, 1
      %p140 = por %p138, %p139
      %p141 = scmp.ne.s32.totalorder %s133, %s136
      %p142 = scmp.eq.s32.totalorder %s15, 0
      %p143 = por %p141, %p142
      %p144 = scmp.ne.s32.totalorder %s133, %s136
      %p145 = scmp.eq.s32.totalorder %s20, 1
      %p146 = por %p144, %p145
      %p147 = scmp.ne.s32.totalorder %s136, %s137
      %p148 = scmp.eq.s32.totalorder %s20, 0
      %p149 = por %p147, %p148
      %p150 = scmp.ne.s32.totalorder %s136, %s137
      %p151 = scmp.eq.s32.totalorder %s21, 1
      %p152 = por %p150, %p151
      %p154 = scmp.ne.s32.totalorder %s137, %s153
      %p155 = scmp.eq.s32.totalorder %s21, 0
      %p156 = por %p154, %p155
      %s157 = ssub.s32 %s23, %s30
      %s158 = ssub.s32 %s22, %s34
      %s159 = sor.u32 %s157, %s158
      %p160 = scmp.eq.s32.totalorder %s159, 0
      %s162 = sadd.s32 %s161, 1
      %s163 = scalar_select %p160, %s161, %s162
      %p166 = pneg %p160
      %p167 = scmp.eq.s32.totalorder %s15, 1
      %p168 = por %p166, %p167
      %p169 = scmp.ne.s32.totalorder %s161, %s164
      %p170 = scmp.eq.s32.totalorder %s15, 0
      %p171 = por %p169, %p170
      %p172 = scmp.ne.s32.totalorder %s161, %s164
      %p173 = scmp.eq.s32.totalorder %s20, 1
      %p174 = por %p172, %p173
      %p175 = scmp.ne.s32.totalorder %s164, %s165
      %p176 = scmp.eq.s32.totalorder %s20, 0
      %p177 = por %p175, %p176
      %p178 = scmp.ne.s32.totalorder %s164, %s165
      %p179 = scmp.eq.s32.totalorder %s21, 1
      %p180 = por %p178, %p179
      %p182 = scmp.ne.s32.totalorder %s165, %s181
      %p183 = scmp.eq.s32.totalorder %s21, 0
      %p184 = por %p182, %p183
      %p185 = scmp.le.s32.totalorder 1, %s15
      %p186 = scmp.lt.s32.totalorder %s15, 3
      %p187 = pnand %p185, %p186
      %p188 = pneg %p187
      // Predicated region
      $region9: #{_lambda_.3} parent=5 // pred_check
        _
      $region10: #{_lambda_.3} parent=5 // pred_check_branch
        %190 = sbr.rel (%p187) target = $region12
      $region11: #{_lambda_.3} parent=5 // pred_region
        %s191 = ssub.s32 %s15, 1
        // Predicated region
        $region13: #{_lambda_.3} parent=11 // pred_check
          %p192 = pneg %p100
        $region14: #{_lambda_.3} parent=11 // pred_check_branch
          %194 = sbr.rel (%p192) target = $region16
        $region15: #{_lambda_.3} parent=11 // pred_region
          _
        $region16: #{_lambda_.3} parent=11 // pred_fallthru
          _
        // Predicated region
        $region17: #{_lambda_.3} parent=11 // pred_check
          %p195 = pneg %p121
        $region18: #{_lambda_.3} parent=11 // pred_check_branch
          %197 = sbr.rel (%p195) target = $region20
        $region19: #{_lambda_.3} parent=11 // pred_region
          _
        $region20: #{_lambda_.3} parent=11 // pred_fallthru
          _
      $region12: #{_lambda_.3} parent=5 // pred_fallthru
        _
      %p198 = scmp.lt.s32.totalorder %s15, 2
      // Predicated region
      $region21: #{_lambda_.3} parent=5 // pred_check
        %p199 = pneg %p198
      $region22: #{_lambda_.3} parent=5 // pred_check_branch
        %201 = sbr.rel (%p199) target = $region24
      $region23: #{_lambda_.3} parent=5 // pred_region
        // Predicated region
        $region25: #{_lambda_.3} parent=23 // pred_check
          %p202 = pneg %p47
        $region26: #{_lambda_.3} parent=23 // pred_check_branch
          %204 = sbr.rel (%p202) target = $region28
        $region27: #{_lambda_.3} parent=23 // pred_region
          %s205 = sand.u32 %s37, 1
          %s206 = sand.u32 %s37, 1
          %s207 = smul.addr %s206, 64
          %s208 = scalar_lea.vmem [#allocation3], %s207
          %s209 = smul.addr %s22, 4
          %s210 = scalar_lea.vmem %s0, %s209
          // Predicated region
          $region29: #{_lambda_.3} parent=27 // pred_check
            _
          $region30: #{_lambda_.3} parent=27 // pred_check_branch
            %212 = sbr.rel (0) target = $region32
          $region31: #{_lambda_.3} parent=27 // pred_region
            // Predicated region
            $region33: #{_lambda_.3} parent=31 // pred_check
              _
            $region34: #{_lambda_.3} parent=31 // pred_check_branch
              %214 = sbr.rel target = $region36
            $region35: #{_lambda_.3} parent=31 // pred_region
              // Predicated region
              $region48: #{_lambda_.3} parent=35 // pred_check
                _
              $region49: #{_lambda_.3} parent=35 // pred_check_branch
                %259 = sbr.rel (0) target = $region51
              $region50: #{_lambda_.3} parent=35 // pred_region
                loop: start=0, step=1, limit=1
                $region52: #{_lambda_.3} parent=50 // loop_pre_header
                  _
                $region53: #{_lambda_.3} parent=50 // loop_header
                  %s261 = sphi 0, %s265
                  %p262 = scmp.ge.s32.totalorder %s261, 1
                  %s266 = sphi %s210, %s210
                  %s267 = sphi %s208, %s208
                $region54: #{_lambda_.3} parent=50 // loop_header_branch
                  %264 = sbr.rel (%p262) target = $region58
                $region55: #{_lambda_.3} parent=50 // loop_body
                  _
                $region56: #{_lambda_.3} parent=50 // loop_footer
                  %s265 = sadd.s32 1, %s261
                $region57: #{_lambda_.3} parent=50 // loop_footer_branch
                  %260 = sbr.rel target = $region53
                $region58: #{_lambda_.3} parent=50 // loop_exit
                  _
                loop: start=0, step=1, limit=1
                $region59: #{_lambda_.3} parent=50 // loop_pre_header
                  _
                $region60: #{_lambda_.3} parent=50 // loop_header
                  %s270 = sphi 0, %s274
                  %p271 = scmp.ge.s32.totalorder %s270, 1
                  %s275 = sphi %s210, %s210
                  %s276 = sphi %s208, %s208
                $region61: #{_lambda_.3} parent=50 // loop_header_branch
                  %273 = sbr.rel (%p271) target = $region65
                $region62: #{_lambda_.3} parent=50 // loop_body
                  %v277 = vld [vmem:[%s275] sm:$0xf]
                  %278 = vst [vmem:[%s276] sm:$0xf] %v277
                  %v279 = vld [vmem:[%s275 + $0x8] sm:$0xf]
                  %280 = vst [vmem:[%s276 + $0x4] sm:$0xf] %v279
                  %v281 = vld [vmem:[%s275 + $0x10] sm:$0xf]
                  %282 = vst [vmem:[%s276 + $0x8] sm:$0xf] %v281
                  %v283 = vld [vmem:[%s275 + $0x18] sm:$0xf]
                  %284 = vst [vmem:[%s276 + $0xc] sm:$0xf] %v283
                  %v285 = vld [vmem:[%s275 + $0x20] sm:$0xf]
                  %286 = vst [vmem:[%s276 + $0x10] sm:$0xf] %v285
                  %v287 = vld [vmem:[%s275 + $0x28] sm:$0xf]
                  %288 = vst [vmem:[%s276 + $0x14] sm:$0xf] %v287
                  %v289 = vld [vmem:[%s275 + $0x30] sm:$0xf]
                  %290 = vst [vmem:[%s276 + $0x18] sm:$0xf] %v289
                  %v291 = vld [vmem:[%s275 + $0x38] sm:$0xf]
                  %292 = vst [vmem:[%s276 + $0x1c] sm:$0xf] %v291
                  %v293 = vld [vmem:[%s275 + $0x40] sm:$0xf]
                  %294 = vst [vmem:[%s276 + $0x20] sm:$0xf] %v293
                  %v295 = vld [vmem:[%s275 + $0x48] sm:$0xf]
                  %296 = vst [vmem:[%s276 + $0x24] sm:$0xf] %v295
                  %v297 = vld [vmem:[%s275 + $0x50] sm:$0xf]
                  %298 = vst [vmem:[%s276 + $0x28] sm:$0xf] %v297
                  %v299 = vld [vmem:[%s275 + $0x58] sm:$0xf]
                  %300 = vst [vmem:[%s276 + $0x2c] sm:$0xf] %v299
                  %v301 = vld [vmem:[%s275 + $0x60] sm:$0xf]
                  %302 = vst [vmem:[%s276 + $0x30] sm:$0xf] %v301
                  %v303 = vld [vmem:[%s275 + $0x68] sm:$0xf]
                  %304 = vst [vmem:[%s276 + $0x34] sm:$0xf] %v303
                  %v305 = vld [vmem:[%s275 + $0x70] sm:$0xf]
                  %306 = vst [vmem:[%s276 + $0x38] sm:$0xf] %v305
                  %v307 = vld [vmem:[%s275 + $0x78] sm:$0xf]
                  %308 = vst [vmem:[%s276 + $0x3c] sm:$0xf] %v307
                $region63: #{_lambda_.3} parent=50 // loop_footer
                  %s274 = sadd.s32 1, %s270
                $region64: #{_lambda_.3} parent=50 // loop_footer_branch
                  %269 = sbr.rel target = $region60
                $region65: #{_lambda_.3} parent=50 // loop_exit
                  _
              $region51: #{_lambda_.3} parent=35 // pred_fallthru
                _
            $region36: #{_lambda_.3} parent=31 // pred_fallthru
              _
            // Predicated region
            $region37: #{_lambda_.3} parent=31 // pred_check
              _
            $region38: #{_lambda_.3} parent=31 // pred_check_branch
              %216 = sbr.rel (0) target = $region40
            $region39: #{_lambda_.3} parent=31 // pred_region
              loop: start=0, step=1, limit=1
              $region41: #{_lambda_.3} parent=39 // loop_pre_header
                _
              $region42: #{_lambda_.3} parent=39 // loop_header
                %s219 = sphi 0, %s223
                %p220 = scmp.ge.s32.totalorder %s219, 1
                %s224 = sphi %s210, %s210
                %s225 = sphi %s208, %s208
              $region43: #{_lambda_.3} parent=39 // loop_header_branch
                %222 = sbr.rel (%p220) target = $region47
              $region44: #{_lambda_.3} parent=39 // loop_body
                %v226 = vld [vmem:[%s224] sm:$0xf]
                %227 = vst [vmem:[%s225] sm:$0xf] %v226
                %v228 = vld [vmem:[%s224 + $0x8] sm:$0xf]
                %229 = vst [vmem:[%s225 + $0x4] sm:$0xf] %v228
                %v230 = vld [vmem:[%s224 + $0x10] sm:$0xf]
                %231 = vst [vmem:[%s225 + $0x8] sm:$0xf] %v230
                %v232 = vld [vmem:[%s224 + $0x18] sm:$0xf]
                %233 = vst [vmem:[%s225 + $0xc] sm:$0xf] %v232
                %v234 = vld [vmem:[%s224 + $0x20] sm:$0xf]
                %235 = vst [vmem:[%s225 + $0x10] sm:$0xf] %v234
                %v236 = vld [vmem:[%s224 + $0x28] sm:$0xf]
                %237 = vst [vmem:[%s225 + $0x14] sm:$0xf] %v236
                %v238 = vld [vmem:[%s224 + $0x30] sm:$0xf]
                %239 = vst [vmem:[%s225 + $0x18] sm:$0xf] %v238
                %v240 = vld [vmem:[%s224 + $0x38] sm:$0xf]
                %241 = vst [vmem:[%s225 + $0x1c] sm:$0xf] %v240
                %v242 = vld [vmem:[%s224 + $0x40] sm:$0xf]
                %243 = vst [vmem:[%s225 + $0x20] sm:$0xf] %v242
                %v244 = vld [vmem:[%s224 + $0x48] sm:$0xf]
                %245 = vst [vmem:[%s225 + $0x24] sm:$0xf] %v244
                %v246 = vld [vmem:[%s224 + $0x50] sm:$0xf]
                %247 = vst [vmem:[%s225 + $0x28] sm:$0xf] %v246
                %v248 = vld [vmem:[%s224 + $0x58] sm:$0xf]
                %249 = vst [vmem:[%s225 + $0x2c] sm:$0xf] %v248
                %v250 = vld [vmem:[%s224 + $0x60] sm:$0xf]
                %251 = vst [vmem:[%s225 + $0x30] sm:$0xf] %v250
                %v252 = vld [vmem:[%s224 + $0x68] sm:$0xf]
                %253 = vst [vmem:[%s225 + $0x34] sm:$0xf] %v252
                %v254 = vld [vmem:[%s224 + $0x70] sm:$0xf]
                %255 = vst [vmem:[%s225 + $0x38] sm:$0xf] %v254
                %v256 = vld [vmem:[%s224 + $0x78] sm:$0xf]
                %257 = vst [vmem:[%s225 + $0x3c] sm:$0xf] %v256
              $region45: #{_lambda_.3} parent=39 // loop_footer
                %s223 = sadd.s32 1, %s219
              $region46: #{_lambda_.3} parent=39 // loop_footer_branch
                %218 = sbr.rel target = $region42
              $region47: #{_lambda_.3} parent=39 // loop_exit
                _
            $region40: #{_lambda_.3} parent=31 // pred_fallthru
              _
          $region32: #{_lambda_.3} parent=27 // pred_fallthru
            _
          %309 = vnop
        $region28: #{_lambda_.3} parent=23 // pred_fallthru
          _
        // Predicated region
        $region66: #{_lambda_.3} parent=23 // pred_check
          %p310 = pneg %p73
        $region67: #{_lambda_.3} parent=23 // pred_check_branch
          %312 = sbr.rel (%p310) target = $region69
        $region68: #{_lambda_.3} parent=23 // pred_region
          %p313 = scmp.lt.s32.totalorder %s22, 1
          %s314 = scalar_select %p313, %s22, 1
          %s315 = scalar_lea.vmem %s1, %s314
        $region69: #{_lambda_.3} parent=23 // pred_fallthru
          _
      $region24: #{_lambda_.3} parent=5 // pred_fallthru
        _
      %p316 = scmp.le.s32.totalorder 1, %s15
      %p317 = scmp.lt.s32.totalorder %s15, 3
      %p318 = pnand %p316, %p317
      %p319 = pneg %p318
      // Predicated region
      $region70: #{_lambda_.3} parent=5 // pred_check
        _
      $region71: #{_lambda_.3} parent=5 // pred_check_branch
        %321 = sbr.rel (%p318) target = $region73
      $region72: #{_lambda_.3} parent=5 // pred_region
        %s322 = ssub.s32 %s15, 1
        %s323 = sand.u32 %s40, 1
        %s324 = sand.u32 %s40, 1
        %s325 = smul.addr %s324, 64
        %s326 = scalar_lea.vmem [#allocation3], %s325
        // Predicated region
        $region74: #{_lambda_.3} parent=72 // pred_check
          %p327 = pneg %p53
        $region75: #{_lambda_.3} parent=72 // pred_check_branch
          %329 = sbr.rel (%p327) target = $region77
        $region76: #{_lambda_.3} parent=72 // pred_region
          _
        $region77: #{_lambda_.3} parent=72 // pred_fallthru
          _
        %s330 = sand.u32 %s40, 1
        %s331 = sand.u32 %s40, 1
        %s332 = smul.addr %s331, 64
        %s333 = scalar_lea.vmem [#allocation3], %s332
        %p334 = pneg %p53
        %p335 = pneg %p50
        %p336 = scmp.lt.s32.totalorder %s24, 1
        %s337 = scalar_select %p336, %s24, 1
        %s338 = scalar_lea.vmem %s1, %s337
        %p339 = pneg %p79
        %p340 = pneg %p76
        %p341 = pneg %p100
        %p342 = pneg %p97
        %p343 = pneg %p121
        %p344 = pneg %p118
        %p345 = pneg %p149
        %p346 = pneg %p146
        %s347 = sand.u32 %s136, 1
        %s348 = scalar_lea.sflag [#allocation5], %s347
        %s349 = sand.u32 %s136, 1
        %s350 = smul.addr %s349, 64
        %s351 = scalar_lea.vmem [#allocation4], %s350
        %p352 = pneg %p177
        %p353 = pneg %p174
        %s354 = sand.u32 %s164, 1
        %s355 = sand.u32 %s164, 1
        %s356 = smul.addr %s355, 16
        %s357 = scalar_lea.vmem [#allocation6], %s356
        %p358 = scmp.lt.s32.totalorder %s24, 1
        %s359 = scalar_select %p358, %s24, 1
        %s360 = scalar_lea.vmem %s1, %s359
        %s361 = smul.u32 2, %s25
        %s362 = smul.u32 2, %s25
        %s363 = smul.u32 %s25, 16
        %v364 = vld [vmem:[%s360] sm:$0x1]
        %v366 = vlaneseq
        %v367 = vshrl.u32 %v366, 7
        %v368 = vsub.s32 0, %v367
        %v369 = vrot.slane %v364, %v368
        %s371 = smul.u32 %s363, 4
        %s372 = scalar_lea.vmem %s326, %s371 [#allocation3]
        %v373 = vld [vmem:[%s372] sm:$0x1]
        %v374 = vld [vmem:[%s372 + $0x4] sm:$0x1]
        %v375 = vld [vmem:[%s372 + $0x8] sm:$0x1]
        %v376 = vld [vmem:[%s372 + $0xc] sm:$0x1]
        %v377 = vld [vmem:[%s372 + $0x10] sm:$0x1]
        %v378 = vld [vmem:[%s372 + $0x14] sm:$0x1]
        %v379 = vld [vmem:[%s372 + $0x18] sm:$0x1]
        %v380 = vld [vmem:[%s372 + $0x1c] sm:$0x1]
        %v381 = vld [vmem:[%s372 + $0x20] sm:$0x1]
        %v382 = vld [vmem:[%s372 + $0x24] sm:$0x1]
        %v383 = vld [vmem:[%s372 + $0x28] sm:$0x1]
        %v384 = vld [vmem:[%s372 + $0x2c] sm:$0x1]
        %v385 = vld [vmem:[%s372 + $0x30] sm:$0x1]
        %v386 = vld [vmem:[%s372 + $0x34] sm:$0x1]
        %v387 = vld [vmem:[%s372 + $0x38] sm:$0x1]
        %v388 = vld [vmem:[%s372 + $0x3c] sm:$0x1]
        %v389 = vmul.f32 %v373, 0.17677669
        %v390 = vmul.f32 %v374, 0.17677669
        %v391 = vmul.f32 %v375, 0.17677669
        %v392 = vmul.f32 %v376, 0.17677669
        %v393 = vmul.f32 %v377, 0.17677669
        %v394 = vmul.f32 %v378, 0.17677669
        %v395 = vmul.f32 %v379, 0.17677669
        %v396 = vmul.f32 %v380, 0.17677669
        %v397 = vmul.f32 %v381, 0.17677669
        %v398 = vmul.f32 %v382, 0.17677669
        %v399 = vmul.f32 %v383, 0.17677669
        %v400 = vmul.f32 %v384, 0.17677669
        %v401 = vmul.f32 %v385, 0.17677669
        %v402 = vmul.f32 %v386, 0.17677669
        %v403 = vmul.f32 %v387, 0.17677669
        %v404 = vmul.f32 %v388, 0.17677669
        %v405 = vld [vmem:[%s326 + $0x1] sm:$0x1]
        %v406 = vld [vmem:[%s326 + $0x5] sm:$0x1]
        %v407 = vld [vmem:[%s326 + $0x9] sm:$0x1]
        %v408 = vld [vmem:[%s326 + $0xd] sm:$0x1]
        %v409 = vld [vmem:[%s326 + $0x11] sm:$0x1]
        %v410 = vld [vmem:[%s326 + $0x15] sm:$0x1]
        %v411 = vld [vmem:[%s326 + $0x19] sm:$0x1]
        %v412 = vld [vmem:[%s326 + $0x1d] sm:$0x1]
        %v413 = vld [vmem:[%s326 + $0x21] sm:$0x1]
        %v414 = vld [vmem:[%s326 + $0x25] sm:$0x1]
        %v415 = vld [vmem:[%s326 + $0x29] sm:$0x1]
        %v416 = vld [vmem:[%s326 + $0x2d] sm:$0x1]
        %v417 = vld [vmem:[%s326 + $0x31] sm:$0x1]
        %v418 = vld [vmem:[%s326 + $0x35] sm:$0x1]
        %v419 = vld [vmem:[%s326 + $0x39] sm:$0x1]
        %v420 = vld [vmem:[%s326 + $0x3d] sm:$0x1]
        %v421 = vld [vmem:[%s326 + $0x2] sm:$0x1]
        %v422 = vld [vmem:[%s326 + $0x6] sm:$0x1]
        %v423 = vld [vmem:[%s326 + $0xa] sm:$0x1]
        %v424 = vld [vmem:[%s326 + $0xe] sm:$0x1]
        %v425 = vld [vmem:[%s326 + $0x12] sm:$0x1]
        %v426 = vld [vmem:[%s326 + $0x16] sm:$0x1]
        %v427 = vld [vmem:[%s326 + $0x1a] sm:$0x1]
        %v428 = vld [vmem:[%s326 + $0x1e] sm:$0x1]
        %v429 = vld [vmem:[%s326 + $0x22] sm:$0x1]
        %v430 = vld [vmem:[%s326 + $0x26] sm:$0x1]
        %v431 = vld [vmem:[%s326 + $0x2a] sm:$0x1]
        %v432 = vld [vmem:[%s326 + $0x2e] sm:$0x1]
        %v433 = vld [vmem:[%s326 + $0x32] sm:$0x1]
        %v434 = vld [vmem:[%s326 + $0x36] sm:$0x1]
        %v435 = vld [vmem:[%s326 + $0x3a] sm:$0x1]
        %v436 = vld [vmem:[%s326 + $0x3e] sm:$0x1]
        %v453 = vrot.slane %v390, 7
        %vm454 = vcmask 1041409
        %v455 = vsel %vm454, %v453, %v389
        %v456 = vrot.slane %v391, 6
        %vm457 = vcmask 1042434
        %v458 = vsel %vm457, %v456, %v455
        %v459 = vrot.slane %v392, 5
        %vm460 = vcmask 1043459
        %v461 = vsel %vm460, %v459, %v458
        %v462 = vrot.slane %v393, 4
        %vm463 = vcmask 1044484
        %v464 = vsel %vm463, %v462, %v461
        %v465 = vrot.slane %v394, 3
        %vm466 = vcmask 1045509
        %v467 = vsel %vm466, %v465, %v464
        %v468 = vrot.slane %v395, 2
        %vm469 = vcmask 1046534
        %v470 = vsel %vm469, %v468, %v467
        %v471 = vrot.slane %v396, 1
        %vm472 = vcmask 1047559
        %v473 = vsel %vm472, %v471, %v470
        %v474 = vrot.slane %v398, 7
        %v475 = vsel %vm454, %v474, %v397
        %v476 = vrot.slane %v399, 6
        %v477 = vsel %vm457, %v476, %v475
        %v478 = vrot.slane %v400, 5
        %v479 = vsel %vm460, %v478, %v477
        %v480 = vrot.slane %v401, 4
        %v481 = vsel %vm463, %v480, %v479
        %v482 = vrot.slane %v402, 3
        %v483 = vsel %vm466, %v482, %v481
        %v484 = vrot.slane %v403, 2
        %v485 = vsel %vm469, %v484, %v483
        %v486 = vrot.slane %v404, 1
        %v487 = vsel %vm472, %v486, %v485
        %v504 = vrot.slane %v406, 7
        %v505 = vsel %vm454, %v504, %v405
        %v506 = vrot.slane %v407, 6
        %v507 = vsel %vm457, %v506, %v505
        %v508 = vrot.slane %v408, 5
        %v509 = vsel %vm460, %v508, %v507
        %v510 = vrot.slane %v409, 4
        %v511 = vsel %vm463, %v510, %v509
        %v512 = vrot.slane %v410, 3
        %v513 = vsel %vm466, %v512, %v511
        %v514 = vrot.slane %v411, 2
        %v515 = vsel %vm469, %v514, %v513
        %v516 = vrot.slane %v412, 1
        %v517 = vsel %vm472, %v516, %v515
        %v518 = vrot.slane %v414, 7
        %v519 = vsel %vm454, %v518, %v413
        %v520 = vrot.slane %v415, 6
        %v521 = vsel %vm457, %v520, %v519
        %v522 = vrot.slane %v416, 5
        %v523 = vsel %vm460, %v522, %v521
        %v524 = vrot.slane %v417, 4
        %v525 = vsel %vm463, %v524, %v523
        %v526 = vrot.slane %v418, 3
        %v527 = vsel %vm466, %v526, %v525
        %v528 = vrot.slane %v419, 2
        %v529 = vsel %vm469, %v528, %v527
        %v530 = vrot.slane %v420, 1
        %v531 = vsel %vm472, %v530, %v529
        %vm532 = vcmask 261120
        %v533 = vsel %vm532, %v473, 0
        %v535 = vsel %vm532, %v487, 0
        %v537 = vsel %vm532, %v517, 0
        %v539 = vsel %vm532, %v531, 0
        %541 = vmatprep.subr.mxu0 0.0
        %542 = vmatpush1.xpose.msra.mxu0 %v537
        %543 = vmatprep.subr.mxu0 0.0
        %544 = vmatpush1.xpose.msra.mxu0 %v539
        %545 = vmatprep.subr.mxu0 0.0
        %546 = vmatpush1.xpose.msra.mxu0 0.0
        %547 = vmatprep.subr.mxu0 0.0
        %548 = vmatpush1.xpose.msra.mxu0 0.0
        %549 = vmatprep.subr.mxu0 0.0
        %550 = vmatpush1.xpose.msra.mxu0 0.0
        %551 = vmatprep.subr.mxu0 0.0
        %552 = vmatpush1.xpose.msra.mxu0 0.0
        %553 = vmatprep.subr.mxu0 0.0
        %554 = vmatpush1.xpose.msra.mxu0 0.0
        %555 = vmatprep.subr.mxu0 0.0
        %556 = vmatpush1.xpose.msra.mxu0 0.0
        %557 = vmatprep.subr.mxu0 0.0
        %558 = vmatpush1.xpose.msra.mxu0 0.0
        %559 = vmatprep.subr.mxu0 0.0
        %560 = vmatpush1.xpose.msra.mxu0 0.0
        %561 = vmatprep.subr.mxu0 0.0
        %562 = vmatpush1.xpose.msra.mxu0 0.0
        %563 = vmatprep.subr.mxu0 0.0
        %564 = vmatpush1.xpose.msra.mxu0 0.0
        %565 = vmatprep.subr.mxu0 0.0
        %566 = vmatpush1.xpose.msra.mxu0 0.0
        %567 = vmatprep.subr.mxu0 0.0
        %568 = vmatpush1.xpose.msra.mxu0 0.0
        %569 = vmatprep.subr.mxu0 0.0
        %570 = vmatpush1.xpose.msra.mxu0 0.0
        %571 = vmatprep.subr.mxu0 0.0
        %572 = vmatpush1.xpose.msra.mxu0 0.0
        %573 = vmatprep.subr.mxu0 0.0
        %574 = vmatpush1.xpose.msra.mxu0 0.0
        %575 = vmatprep.subr.mxu0 0.0
        %576 = vmatpush1.xpose.msra.mxu0 0.0
        %577 = vmatprep.subr.mxu0 0.0
        %578 = vmatpush1.xpose.msra.mxu0 0.0
        %579 = vmatprep.subr.mxu0 0.0
        %580 = vmatpush1.xpose.msra.mxu0 0.0
        %581 = vmatprep.subr.mxu0 0.0
        %582 = vmatpush1.xpose.msra.mxu0 0.0
        %583 = vmatprep.subr.mxu0 0.0
        %584 = vmatpush1.xpose.msra.mxu0 0.0
        %585 = vmatprep.subr.mxu0 0.0
        %586 = vmatpush1.xpose.msra.mxu0 0.0
        %587 = vmatprep.subr.mxu0 0.0
        %588 = vmatpush1.xpose.msra.mxu0 0.0
        %589 = vmatprep.subr.mxu0 0.0
        %590 = vmatpush1.xpose.msra.mxu0 0.0
        %591 = vmatprep.subr.mxu0 0.0
        %592 = vmatpush1.xpose.msra.mxu0 0.0
        %593 = vmatprep.subr.mxu0 0.0
        %594 = vmatpush1.xpose.msra.mxu0 0.0
        %595 = vmatprep.subr.mxu0 0.0
        %596 = vmatpush1.xpose.msra.mxu0 0.0
        %597 = vmatprep.subr.mxu0 0.0
        %598 = vmatpush1.xpose.msra.mxu0 0.0
        %599 = vmatprep.subr.mxu0 0.0
        %600 = vmatpush1.xpose.msra.mxu0 0.0
        %601 = vmatprep.subr.mxu0 0.0
        %602 = vmatpush1.xpose.msra.mxu0 0.0
        %603 = vmatprep.subr.mxu0 0.0
        %604 = vmatpush1.xpose.msra.mxu0 0.0
        %605 = vmatprep.mubr.f32.mxu0 0.0
        %606 = vmatmul.mubr.f32.gmra.mrb[0].mxu0 %v533
        %v607 = vpop.f32.mrb[0].mxu0
        %v608 = vadd.f32 0.0, %v607
        %v609 = vpop.f32.mrb[0].mxu0
        %610 = vmatprep.mubr.f32.mxu0 0.0
        %611 = vmatmul.mubr.f32.gmra.mrb[0].mxu0 %v535
        %v612 = vpop.f32.mrb[0].mxu0
        %v613 = vadd.f32 0.0, %v612
        %v614 = vpop.f32.mrb[0].mxu0
        %615 = vdwg.mxu0
        %vm616 = vcmask 130048
        %617 = vst.msk [vmem:[%s351] sm:$0xff] %vm616, %v608
        %618 = vst.msk [vmem:[%s351 + $0x8] sm:$0xff] %vm616, %v613
        %v619 = vadd.f32 %v608, %v369
        %v620 = vadd.f32 %v613, %v369
        %v621 = vsel %vm616, %v619, -inf
        %622 = vmax.xlane.f32.xlu0 %v621
        %v623 = vpop.xlane.xlu0 %622
        %v624 = vsel %vm616, %v620, -inf
        %625 = vmax.xlane.f32.xlu0 %v624
        %v626 = vpop.xlane.xlu0 %625
        %v627 = vsub.f32 %v619, %v623
        %v628 = vsub.f32 %v620, %v626
        %v629 = vmul.f32 %v627, 1.442695
        %v630 = vpow.pop %v629
        %v631 = vmul.f32 %v628, 1.442695
        %v632 = vpow.pop %v631
        %v633 = vsel %vm616, %v630, 0.0
        %634 = vadd.xlane.f32.xlu0 %v633
        %v635 = vpop.xlane.xlu0 %634
        %v636 = vsel %vm616, %v632, 0.0
        %637 = vadd.xlane.f32.xlu0 %v636
        %v638 = vpop.xlane.xlu0 %637
        %v639 = vrcp.pop %v635
        %v640 = vmul.f32 1.0, %v639
        %v641 = vrcp.pop %v638
        %v642 = vmul.f32 1.0, %v641
        %v643 = vmul.f32 %v630, %v640
        %v644 = vmul.f32 %v632, %v642
        %v661 = vrot.slane %v422, 7
        %v662 = vsel %vm454, %v661, %v421
        %v663 = vrot.slane %v423, 6
        %v664 = vsel %vm457, %v663, %v662
        %v665 = vrot.slane %v424, 5
        %v666 = vsel %vm460, %v665, %v664
        %v667 = vrot.slane %v425, 4
        %v668 = vsel %vm463, %v667, %v666
        %v669 = vrot.slane %v426, 3
        %v670 = vsel %vm466, %v669, %v668
        %v671 = vrot.slane %v427, 2
        %v672 = vsel %vm469, %v671, %v670
        %v673 = vrot.slane %v428, 1
        %v674 = vsel %vm472, %v673, %v672
        %v675 = vrot.slane %v430, 7
        %v676 = vsel %vm454, %v675, %v429
        %v677 = vrot.slane %v431, 6
        %v678 = vsel %vm457, %v677, %v676
        %v679 = vrot.slane %v432, 5
        %v680 = vsel %vm460, %v679, %v678
        %v681 = vrot.slane %v433, 4
        %v682 = vsel %vm463, %v681, %v680
        %v683 = vrot.slane %v434, 3
        %v684 = vsel %vm466, %v683, %v682
        %v685 = vrot.slane %v435, 2
        %v686 = vsel %vm469, %v685, %v684
        %v687 = vrot.slane %v436, 1
        %v688 = vsel %vm472, %v687, %v686
        %v692 = vsel %vm616, %v643, 0
        %v695 = vsel %vm616, %v644, 0
        %697 = vmatprep.subr.mxu0 0.0
        %698 = vmatpush1.msra.mxu0 %v674
        %699 = vmatprep.subr.mxu0 0.0
        %700 = vmatpush1.msra.mxu0 %v688
        %701 = vmatprep.subr.mxu0 0.0
        %702 = vmatpush1.msra.mxu0 0.0
        %703 = vmatprep.subr.mxu0 0.0
        %704 = vmatpush1.msra.mxu0 0.0
        %705 = vmatprep.subr.mxu0 0.0
        %706 = vmatpush1.msra.mxu0 0.0
        %707 = vmatprep.subr.mxu0 0.0
        %708 = vmatpush1.msra.mxu0 0.0
        %709 = vmatprep.subr.mxu0 0.0
        %710 = vmatpush1.msra.mxu0 0.0
        %711 = vmatprep.subr.mxu0 0.0
        %712 = vmatpush1.msra.mxu0 0.0
        %713 = vmatprep.subr.mxu0 0.0
        %714 = vmatpush1.msra.mxu0 0.0
        %715 = vmatprep.subr.mxu0 0.0
        %716 = vmatpush1.msra.mxu0 0.0
        %717 = vmatprep.subr.mxu0 0.0
        %718 = vmatpush1.msra.mxu0 0.0
        %719 = vmatprep.subr.mxu0 0.0
        %720 = vmatpush1.msra.mxu0 0.0
        %721 = vmatprep.subr.mxu0 0.0
        %722 = vmatpush1.msra.mxu0 0.0
        %723 = vmatprep.subr.mxu0 0.0
        %724 = vmatpush1.msra.mxu0 0.0
        %725 = vmatprep.subr.mxu0 0.0
        %726 = vmatpush1.msra.mxu0 0.0
        %727 = vmatprep.subr.mxu0 0.0
        %728 = vmatpush1.msra.mxu0 0.0
        %729 = vmatprep.subr.mxu0 0.0
        %730 = vmatpush1.msra.mxu0 0.0
        %731 = vmatprep.subr.mxu0 0.0
        %732 = vmatpush1.msra.mxu0 0.0
        %733 = vmatprep.subr.mxu0 0.0
        %734 = vmatpush1.msra.mxu0 0.0
        %735 = vmatprep.subr.mxu0 0.0
        %736 = vmatpush1.msra.mxu0 0.0
        %737 = vmatprep.subr.mxu0 0.0
        %738 = vmatpush1.msra.mxu0 0.0
        %739 = vmatprep.subr.mxu0 0.0
        %740 = vmatpush1.msra.mxu0 0.0
        %741 = vmatprep.subr.mxu0 0.0
        %742 = vmatpush1.msra.mxu0 0.0
        %743 = vmatprep.subr.mxu0 0.0
        %744 = vmatpush1.msra.mxu0 0.0
        %745 = vmatprep.subr.mxu0 0.0
        %746 = vmatpush1.msra.mxu0 0.0
        %747 = vmatprep.subr.mxu0 0.0
        %748 = vmatpush1.msra.mxu0 0.0
        %749 = vmatprep.subr.mxu0 0.0
        %750 = vmatpush1.msra.mxu0 0.0
        %751 = vmatprep.subr.mxu0 0.0
        %752 = vmatpush1.msra.mxu0 0.0
        %753 = vmatprep.subr.mxu0 0.0
        %754 = vmatpush1.msra.mxu0 0.0
        %755 = vmatprep.subr.mxu0 0.0
        %756 = vmatpush1.msra.mxu0 0.0
        %757 = vmatprep.subr.mxu0 0.0
        %758 = vmatpush1.msra.mxu0 0.0
        %759 = vmatprep.subr.mxu0 0.0
        %760 = vmatpush1.msra.mxu0 0.0
        %761 = vmatprep.mubr.f32.mxu0 0.0
        %762 = vmatmul.mubr.f32.gmra.mrb[0].mxu0 %v692
        %v763 = vpop.f32.mrb[0].mxu0
        %v764 = vadd.f32 0.0, %v763
        %v765 = vpop.f32.mrb[0].mxu0
        %766 = vmatprep.mubr.f32.mxu0 0.0
        %767 = vmatmul.mubr.f32.gmra.mrb[0].mxu0 %v695
        %v768 = vpop.f32.mrb[0].mxu0
        %v769 = vadd.f32 0.0, %v768
        %v770 = vpop.f32.mrb[0].mxu0
        %771 = vdwg.mxu0
        %772 = vst.msk [vmem:[#allocation2] sm:$0xff] %vm532, %v764
        %773 = vst.msk [vmem:[#allocation2 + $0x8] sm:$0xff] %vm532, %v769
        %v774 = vld [vmem:[%s372] sm:$0x1]
        %v775 = vld [vmem:[%s372 + $0x4] sm:$0x1]
        %v776 = vld [vmem:[%s372 + $0x8] sm:$0x1]
        %v777 = vld [vmem:[%s372 + $0xc] sm:$0x1]
        %v778 = vld [vmem:[%s372 + $0x10] sm:$0x1]
        %v779 = vld [vmem:[%s372 + $0x14] sm:$0x1]
        %v780 = vld [vmem:[%s372 + $0x18] sm:$0x1]
        %v781 = vld [vmem:[%s372 + $0x1c] sm:$0x1]
        %v782 = vld [vmem:[%s372 + $0x20] sm:$0x1]
        %v783 = vld [vmem:[%s372 + $0x24] sm:$0x1]
        %v784 = vld [vmem:[%s372 + $0x28] sm:$0x1]
        %v785 = vld [vmem:[%s372 + $0x2c] sm:$0x1]
        %v786 = vld [vmem:[%s372 + $0x30] sm:$0x1]
        %v787 = vld [vmem:[%s372 + $0x34] sm:$0x1]
        %v788 = vld [vmem:[%s372 + $0x38] sm:$0x1]
        %v789 = vld [vmem:[%s372 + $0x3c] sm:$0x1]
        %v790 = vmul.f32 %v774, 0.17677669
        %v791 = vmul.f32 %v775, 0.17677669
        %v792 = vmul.f32 %v776, 0.17677669
        %v793 = vmul.f32 %v777, 0.17677669
        %v794 = vmul.f32 %v778, 0.17677669
        %v795 = vmul.f32 %v779, 0.17677669
        %v796 = vmul.f32 %v780, 0.17677669
        %v797 = vmul.f32 %v781, 0.17677669
        %v798 = vmul.f32 %v782, 0.17677669
        %v799 = vmul.f32 %v783, 0.17677669
        %v800 = vmul.f32 %v784, 0.17677669
        %v801 = vmul.f32 %v785, 0.17677669
        %v802 = vmul.f32 %v786, 0.17677669
        %v803 = vmul.f32 %v787, 0.17677669
        %v804 = vmul.f32 %v788, 0.17677669
        %v805 = vmul.f32 %v789, 0.17677669
        %v806 = vld [vmem:[%s326 + $0x1] sm:$0x1]
        %v807 = vld [vmem:[%s326 + $0x5] sm:$0x1]
        %v808 = vld [vmem:[%s326 + $0x9] sm:$0x1]
        %v809 = vld [vmem:[%s326 + $0xd] sm:$0x1]
        %v810 = vld [vmem:[%s326 + $0x11] sm:$0x1]
        %v811 = vld [vmem:[%s326 + $0x15] sm:$0x1]
        %v812 = vld [vmem:[%s326 + $0x19] sm:$0x1]
        %v813 = vld [vmem:[%s326 + $0x1d] sm:$0x1]
        %v814 = vld [vmem:[%s326 + $0x21] sm:$0x1]
        %v815 = vld [vmem:[%s326 + $0x25] sm:$0x1]
        %v816 = vld [vmem:[%s326 + $0x29] sm:$0x1]
        %v817 = vld [vmem:[%s326 + $0x2d] sm:$0x1]
        %v818 = vld [vmem:[%s326 + $0x31] sm:$0x1]
        %v819 = vld [vmem:[%s326 + $0x35] sm:$0x1]
        %v820 = vld [vmem:[%s326 + $0x39] sm:$0x1]
        %v821 = vld [vmem:[%s326 + $0x3d] sm:$0x1]
        %v822 = vld [vmem:[%s326 + $0x2] sm:$0x1]
        %v823 = vld [vmem:[%s326 + $0x6] sm:$0x1]
        %v824 = vld [vmem:[%s326 + $0xa] sm:$0x1]
        %v825 = vld [vmem:[%s326 + $0xe] sm:$0x1]
        %v826 = vld [vmem:[%s326 + $0x12] sm:$0x1]
        %v827 = vld [vmem:[%s326 + $0x16] sm:$0x1]
        %v828 = vld [vmem:[%s326 + $0x1a] sm:$0x1]
        %v829 = vld [vmem:[%s326 + $0x1e] sm:$0x1]
        %v830 = vld [vmem:[%s326 + $0x22] sm:$0x1]
        %v831 = vld [vmem:[%s326 + $0x26] sm:$0x1]
        %v832 = vld [vmem:[%s326 + $0x2a] sm:$0x1]
        %v833 = vld [vmem:[%s326 + $0x2e] sm:$0x1]
        %v834 = vld [vmem:[%s326 + $0x32] sm:$0x1]
        %v835 = vld [vmem:[%s326 + $0x36] sm:$0x1]
        %v836 = vld [vmem:[%s326 + $0x3a] sm:$0x1]
        %v837 = vld [vmem:[%s326 + $0x3e] sm:$0x1]
        %v854 = vrot.slane %v791, 7
        %v855 = vsel %vm454, %v854, %v790
        %v856 = vrot.slane %v792, 6
        %v857 = vsel %vm457, %v856, %v855
        %v858 = vrot.slane %v793, 5
        %v859 = vsel %vm460, %v858, %v857
        %v860 = vrot.slane %v794, 4
        %v861 = vsel %vm463, %v860, %v859
        %v862 = vrot.slane %v795, 3
        %v863 = vsel %vm466, %v862, %v861
        %v864 = vrot.slane %v796, 2
        %v865 = vsel %vm469, %v864, %v863
        %v866 = vrot.slane %v797, 1
        %v867 = vsel %vm472, %v866, %v865
        %v868 = vrot.slane %v799, 7
        %v869 = vsel %vm454, %v868, %v798
        %v870 = vrot.slane %v800, 6
        %v871 = vsel %vm457, %v870, %v869
        %v872 = vrot.slane %v801, 5
        %v873 = vsel %vm460, %v872, %v871
        %v874 = vrot.slane %v802, 4
        %v875 = vsel %vm463, %v874, %v873
        %v876 = vrot.slane %v803, 3
        %v877 = vsel %vm466, %v876, %v875
        %v878 = vrot.slane %v804, 2
        %v879 = vsel %vm469, %v878, %v877
        %v880 = vrot.slane %v805, 1
        %v881 = vsel %vm472, %v880, %v879
        %882 = vrot.lane.b32.xlu0 %v867, 96
        %v883 = vpop.permute.xlu0 %882
        %884 = vrot.lane.b32.xlu0 %v881, 96
        %v885 = vpop.permute.xlu0 %884
        %v902 = vrot.slane %v807, 7
        %v903 = vsel %vm454, %v902, %v806
        %v904 = vrot.slane %v808, 6
        %v905 = vsel %vm457, %v904, %v903
        %v906 = vrot.slane %v809, 5
        %v907 = vsel %vm460, %v906, %v905
        %v908 = vrot.slane %v810, 4
        %v909 = vsel %vm463, %v908, %v907
        %v910 = vrot.slane %v811, 3
        %v911 = vsel %vm466, %v910, %v909
        %v912 = vrot.slane %v812, 2
        %v913 = vsel %vm469, %v912, %v911
        %v914 = vrot.slane %v813, 1
        %v915 = vsel %vm472, %v914, %v913
        %v916 = vrot.slane %v815, 7
        %v917 = vsel %vm454, %v916, %v814
        %v918 = vrot.slane %v816, 6
        %v919 = vsel %vm457, %v918, %v917
        %v920 = vrot.slane %v817, 5
        %v921 = vsel %vm460, %v920, %v919
        %v922 = vrot.slane %v818, 4
        %v923 = vsel %vm463, %v922, %v921
        %v924 = vrot.slane %v819, 3
        %v925 = vsel %vm466, %v924, %v923
        %v926 = vrot.slane %v820, 2
        %v927 = vsel %vm469, %v926, %v925
        %v928 = vrot.slane %v821, 1
        %v929 = vsel %vm472, %v928, %v927
        %930 = vrot.lane.b32.xlu0 %v915, 96
        %v931 = vpop.permute.xlu0 %930
        %932 = vrot.lane.b32.xlu0 %v929, 96
        %v933 = vpop.permute.xlu0 %932
        %v934 = vsel %vm532, %v883, 0
        %v936 = vsel %vm532, %v885, 0
        %v938 = vsel %vm532, %v931, 0
        %v940 = vsel %vm532, %v933, 0
        %942 = vmatprep.subr.mxu0 0.0
        %943 = vmatpush1.xpose.msra.mxu0 %v938
        %944 = vmatprep.subr.mxu0 0.0
        %945 = vmatpush1.xpose.msra.mxu0 %v940
        %946 = vmatprep.subr.mxu0 0.0
        %947 = vmatpush1.xpose.msra.mxu0 0.0
        %948 = vmatprep.subr.mxu0 0.0
        %949 = vmatpush1.xpose.msra.mxu0 0.0
        %950 = vmatprep.subr.mxu0 0.0
        %951 = vmatpush1.xpose.msra.mxu0 0.0
        %952 = vmatprep.subr.mxu0 0.0
        %953 = vmatpush1.xpose.msra.mxu0 0.0
        %954 = vmatprep.subr.mxu0 0.0
        %955 = vmatpush1.xpose.msra.mxu0 0.0
        %956 = vmatprep.subr.mxu0 0.0
        %957 = vmatpush1.xpose.msra.mxu0 0.0
        %958 = vmatprep.subr.mxu0 0.0
        %959 = vmatpush1.xpose.msra.mxu0 0.0
        %960 = vmatprep.subr.mxu0 0.0
        %961 = vmatpush1.xpose.msra.mxu0 0.0
        %962 = vmatprep.subr.mxu0 0.0
        %963 = vmatpush1.xpose.msra.mxu0 0.0
        %964 = vmatprep.subr.mxu0 0.0
        %965 = vmatpush1.xpose.msra.mxu0 0.0
        %966 = vmatprep.subr.mxu0 0.0
        %967 = vmatpush1.xpose.msra.mxu0 0.0
        %968 = vmatprep.subr.mxu0 0.0
        %969 = vmatpush1.xpose.msra.mxu0 0.0
        %970 = vmatprep.subr.mxu0 0.0
        %971 = vmatpush1.xpose.msra.mxu0 0.0
        %972 = vmatprep.subr.mxu0 0.0
        %973 = vmatpush1.xpose.msra.mxu0 0.0
        %974 = vmatprep.subr.mxu0 0.0
        %975 = vmatpush1.xpose.msra.mxu0 0.0
        %976 = vmatprep.subr.mxu0 0.0
        %977 = vmatpush1.xpose.msra.mxu0 0.0
        %978 = vmatprep.subr.mxu0 0.0
        %979 = vmatpush1.xpose.msra.mxu0 0.0
        %980 = vmatprep.subr.mxu0 0.0
        %981 = vmatpush1.xpose.msra.mxu0 0.0
        %982 = vmatprep.subr.mxu0 0.0
        %983 = vmatpush1.xpose.msra.mxu0 0.0
        %984 = vmatprep.subr.mxu0 0.0
        %985 = vmatpush1.xpose.msra.mxu0 0.0
        %986 = vmatprep.subr.mxu0 0.0
        %987 = vmatpush1.xpose.msra.mxu0 0.0
        %988 = vmatprep.subr.mxu0 0.0
        %989 = vmatpush1.xpose.msra.mxu0 0.0
        %990 = vmatprep.subr.mxu0 0.0
        %991 = vmatpush1.xpose.msra.mxu0 0.0
        %992 = vmatprep.subr.mxu0 0.0
        %993 = vmatpush1.xpose.msra.mxu0 0.0
        %994 = vmatprep.subr.mxu0 0.0
        %995 = vmatpush1.xpose.msra.mxu0 0.0
        %996 = vmatprep.subr.mxu0 0.0
        %997 = vmatpush1.xpose.msra.mxu0 0.0
        %998 = vmatprep.subr.mxu0 0.0
        %999 = vmatpush1.xpose.msra.mxu0 0.0
        %1000 = vmatprep.subr.mxu0 0.0
        %1001 = vmatpush1.xpose.msra.mxu0 0.0
        %1002 = vmatprep.subr.mxu0 0.0
        %1003 = vmatpush1.xpose.msra.mxu0 0.0
        %1004 = vmatprep.subr.mxu0 0.0
        %1005 = vmatpush1.xpose.msra.mxu0 0.0
        %1006 = vmatprep.mubr.f32.mxu0 0.0
        %1007 = vmatmul.mubr.f32.gmra.mrb[0].mxu0 %v934
        %v1008 = vpop.f32.mrb[0].mxu0
        %v1009 = vadd.f32 0.0, %v1008
        %v1010 = vpop.f32.mrb[0].mxu0
        %1011 = vmatprep.mubr.f32.mxu0 0.0
        %1012 = vmatmul.mubr.f32.gmra.mrb[0].mxu0 %v936
        %v1013 = vpop.f32.mrb[0].mxu0
        %v1014 = vadd.f32 0.0, %v1013
        %v1015 = vpop.f32.mrb[0].mxu0
        %1016 = vdwg.mxu0
        %s1017 = scalar_lea.vmem %s351, 16 [#allocation4]
        %1018 = vst.msk [vmem:[%s1017] sm:$0xff] %vm616, %v1009
        %1019 = vst.msk [vmem:[%s1017 + $0x8] sm:$0xff] %vm616, %v1014
        %v1020 = vadd.f32 %v1009, %v369
        %v1021 = vadd.f32 %v1014, %v369
        %v1022 = vsel %vm616, %v1020, -inf
        %1023 = vmax.xlane.f32.xlu0 %v1022
        %v1024 = vpop.xlane.xlu0 %1023
        %v1025 = vsel %vm616, %v1021, -inf
        %1026 = vmax.xlane.f32.xlu0 %v1025
        %v1027 = vpop.xlane.xlu0 %1026
        %v1028 = vsub.f32 %v1020, %v1024
        %v1029 = vsub.f32 %v1021, %v1027
        %v1030 = vmul.f32 %v1028, 1.442695
        %v1031 = vpow.pop %v1030
        %v1032 = vmul.f32 %v1029, 1.442695
        %v1033 = vpow.pop %v1032
        %v1034 = vsel %vm616, %v1031, 0.0
        %1035 = vadd.xlane.f32.xlu0 %v1034
        %v1036 = vpop.xlane.xlu0 %1035
        %v1037 = vsel %vm616, %v1033, 0.0
        %1038 = vadd.xlane.f32.xlu0 %v1037
        %v1039 = vpop.xlane.xlu0 %1038
        %v1040 = vrcp.pop %v1036
        %v1041 = vmul.f32 1.0, %v1040
        %v1042 = vrcp.pop %v1039
        %v1043 = vmul.f32 1.0, %v1042
        %v1044 = vmul.f32 %v1031, %v1041
        %v1045 = vmul.f32 %v1033, %v1043
        %v1062 = vrot.slane %v823, 7
        %v1063 = vsel %vm454, %v1062, %v822
        %v1064 = vrot.slane %v824, 6
        %v1065 = vsel %vm457, %v1064, %v1063
        %v1066 = vrot.slane %v825, 5
        %v1067 = vsel %vm460, %v1066, %v1065
        %v1068 = vrot.slane %v826, 4
        %v1069 = vsel %vm463, %v1068, %v1067
        %v1070 = vrot.slane %v827, 3
        %v1071 = vsel %vm466, %v1070, %v1069
        %v1072 = vrot.slane %v828, 2
        %v1073 = vsel %vm469, %v1072, %v1071
        %v1074 = vrot.slane %v829, 1
        %v1075 = vsel %vm472, %v1074, %v1073
        %v1076 = vrot.slane %v831, 7
        %v1077 = vsel %vm454, %v1076, %v830
        %v1078 = vrot.slane %v832, 6
        %v1079 = vsel %vm457, %v1078, %v1077
        %v1080 = vrot.slane %v833, 5
        %v1081 = vsel %vm460, %v1080, %v1079
        %v1082 = vrot.slane %v834, 4
        %v1083 = vsel %vm463, %v1082, %v1081
        %v1084 = vrot.slane %v835, 3
        %v1085 = vsel %vm466, %v1084, %v1083
        %v1086 = vrot.slane %v836, 2
        %v1087 = vsel %vm469, %v1086, %v1085
        %v1088 = vrot.slane %v837, 1
        %v1089 = vsel %vm472, %v1088, %v1087
        %1090 = vrot.lane.b32.xlu0 %v1075, 96
        %v1091 = vpop.permute.xlu0 %1090
        %1092 = vrot.lane.b32.xlu0 %v1089, 96
        %v1093 = vpop.permute.xlu0 %1092
        %v1097 = vsel %vm616, %v1044, 0
        %v1100 = vsel %vm616, %v1045, 0
        %1102 = vmatprep.subr.mxu0 0.0
        %1103 = vmatpush1.msra.mxu0 %v1091
        %1104 = vmatprep.subr.mxu0 0.0
        %1105 = vmatpush1.msra.mxu0 %v1093
        %1106 = vmatprep.subr.mxu0 0.0
        %1107 = vmatpush1.msra.mxu0 0.0
        %1108 = vmatprep.subr.mxu0 0.0
        %1109 = vmatpush1.msra.mxu0 0.0
        %1110 = vmatprep.subr.mxu0 0.0
        %1111 = vmatpush1.msra.mxu0 0.0
        %1112 = vmatprep.subr.mxu0 0.0
        %1113 = vmatpush1.msra.mxu0 0.0
        %1114 = vmatprep.subr.mxu0 0.0
        %1115 = vmatpush1.msra.mxu0 0.0
        %1116 = vmatprep.subr.mxu0 0.0
        %1117 = vmatpush1.msra.mxu0 0.0
        %1118 = vmatprep.subr.mxu0 0.0
        %1119 = vmatpush1.msra.mxu0 0.0
        %1120 = vmatprep.subr.mxu0 0.0
        %1121 = vmatpush1.msra.mxu0 0.0
        %1122 = vmatprep.subr.mxu0 0.0
        %1123 = vmatpush1.msra.mxu0 0.0
        %1124 = vmatprep.subr.mxu0 0.0
        %1125 = vmatpush1.msra.mxu0 0.0
        %1126 = vmatprep.subr.mxu0 0.0
        %1127 = vmatpush1.msra.mxu0 0.0
        %1128 = vmatprep.subr.mxu0 0.0
        %1129 = vmatpush1.msra.mxu0 0.0
        %1130 = vmatprep.subr.mxu0 0.0
        %1131 = vmatpush1.msra.mxu0 0.0
        %1132 = vmatprep.subr.mxu0 0.0
        %1133 = vmatpush1.msra.mxu0 0.0
        %1134 = vmatprep.subr.mxu0 0.0
        %1135 = vmatpush1.msra.mxu0 0.0
        %1136 = vmatprep.subr.mxu0 0.0
        %1137 = vmatpush1.msra.mxu0 0.0
        %1138 = vmatprep.subr.mxu0 0.0
        %1139 = vmatpush1.msra.mxu0 0.0
        %1140 = vmatprep.subr.mxu0 0.0
        %1141 = vmatpush1.msra.mxu0 0.0
        %1142 = vmatprep.subr.mxu0 0.0
        %1143 = vmatpush1.msra.mxu0 0.0
        %1144 = vmatprep.subr.mxu0 0.0
        %1145 = vmatpush1.msra.mxu0 0.0
        %1146 = vmatprep.subr.mxu0 0.0
        %1147 = vmatpush1.msra.mxu0 0.0
        %1148 = vmatprep.subr.mxu0 0.0
        %1149 = vmatpush1.msra.mxu0 0.0
        %1150 = vmatprep.subr.mxu0 0.0
        %1151 = vmatpush1.msra.mxu0 0.0
        %1152 = vmatprep.subr.mxu0 0.0
        %1153 = vmatpush1.msra.mxu0 0.0
        %1154 = vmatprep.subr.mxu0 0.0
        %1155 = vmatpush1.msra.mxu0 0.0
        %1156 = vmatprep.subr.mxu0 0.0
        %1157 = vmatpush1.msra.mxu0 0.0
        %1158 = vmatprep.subr.mxu0 0.0
        %1159 = vmatpush1.msra.mxu0 0.0
        %1160 = vmatprep.subr.mxu0 0.0
        %1161 = vmatpush1.msra.mxu0 0.0
        %1162 = vmatprep.subr.mxu0 0.0
        %1163 = vmatpush1.msra.mxu0 0.0
        %1164 = vmatprep.subr.mxu0 0.0
        %1165 = vmatpush1.msra.mxu0 0.0
        %1166 = vmatprep.mubr.f32.mxu0 0.0
        %1167 = vmatmul.mubr.f32.gmra.mrb[0].mxu0 %v1097
        %v1168 = vpop.f32.mrb[0].mxu0
        %v1169 = vadd.f32 0.0, %v1168
        %v1170 = vpop.f32.mrb[0].mxu0
        %1171 = vmatprep.mubr.f32.mxu0 0.0
        %1172 = vmatmul.mubr.f32.gmra.mrb[0].mxu0 %v1100
        %v1173 = vpop.f32.mrb[0].mxu0
        %v1174 = vadd.f32 0.0, %v1173
        %v1175 = vpop.f32.mrb[0].mxu0
        %1176 = vdwg.mxu0
        %1179 = vrot.lane.b32.xlu0 %v1169, 32
        %v1180 = vpop.permute.xlu0 %1179
        %1181 = vrot.lane.b32.xlu0 %v1174, 32
        %v1182 = vpop.permute.xlu0 %1181
        %vm1185 = vcmask 523520
        %1186 = vst.msk [vmem:[#allocation2] sm:$0xff] %vm1185, %v1180
        %1187 = vst.msk [vmem:[#allocation2 + $0x8] sm:$0xff] %vm1185, %v1182
        %v1188 = vld [vmem:[%s372] sm:$0x1]
        %v1189 = vld [vmem:[%s372 + $0x4] sm:$0x1]
        %v1190 = vld [vmem:[%s372 + $0x8] sm:$0x1]
        %v1191 = vld [vmem:[%s372 + $0xc] sm:$0x1]
        %v1192 = vld [vmem:[%s372 + $0x10] sm:$0x1]
        %v1193 = vld [vmem:[%s372 + $0x14] sm:$0x1]
        %v1194 = vld [vmem:[%s372 + $0x18] sm:$0x1]
        %v1195 = vld [vmem:[%s372 + $0x1c] sm:$0x1]
        %v1196 = vld [vmem:[%s372 + $0x20] sm:$0x1]
        %v1197 = vld [vmem:[%s372 + $0x24] sm:$0x1]
        %v1198 = vld [vmem:[%s372 + $0x28] sm:$0x1]
        %v1199 = vld [vmem:[%s372 + $0x2c] sm:$0x1]
        %v1200 = vld [vmem:[%s372 + $0x30] sm:$0x1]
        %v1201 = vld [vmem:[%s372 + $0x34] sm:$0x1]
        %v1202 = vld [vmem:[%s372 + $0x38] sm:$0x1]
        %v1203 = vld [vmem:[%s372 + $0x3c] sm:$0x1]
        %v1204 = vmul.f32 %v1188, 0.17677669
        %v1205 = vmul.f32 %v1189, 0.17677669
        %v1206 = vmul.f32 %v1190, 0.17677669
        %v1207 = vmul.f32 %v1191, 0.17677669
        %v1208 = vmul.f32 %v1192, 0.17677669
        %v1209 = vmul.f32 %v1193, 0.17677669
        %v1210 = vmul.f32 %v1194, 0.17677669
        %v1211 = vmul.f32 %v1195, 0.17677669
        %v1212 = vmul.f32 %v1196, 0.17677669
        %v1213 = vmul.f32 %v1197, 0.17677669
        %v1214 = vmul.f32 %v1198, 0.17677669
        %v1215 = vmul.f32 %v1199, 0.17677669
        %v1216 = vmul.f32 %v1200, 0.17677669
        %v1217 = vmul.f32 %v1201, 0.17677669
        %v1218 = vmul.f32 %v1202, 0.17677669
        %v1219 = vmul.f32 %v1203, 0.17677669
        %v1220 = vld [vmem:[%s326 + $0x1] sm:$0x1]
        %v1221 = vld [vmem:[%s326 + $0x5] sm:$0x1]
        %v1222 = vld [vmem:[%s326 + $0x9] sm:$0x1]
        %v1223 = vld [vmem:[%s326 + $0xd] sm:$0x1]
        %v1224 = vld [vmem:[%s326 + $0x11] sm:$0x1]
        %v1225 = vld [vmem:[%s326 + $0x15] sm:$0x1]
        %v1226 = vld [vmem:[%s326 + $0x19] sm:$0x1]
        %v1227 = vld [vmem:[%s326 + $0x1d] sm:$0x1]
        %v1228 = vld [vmem:[%s326 + $0x21] sm:$0x1]
        %v1229 = vld [vmem:[%s326 + $0x25] sm:$0x1]
        %v1230 = vld [vmem:[%s326 + $0x29] sm:$0x1]
        %v1231 = vld [vmem:[%s326 + $0x2d] sm:$0x1]
        %v1232 = vld [vmem:[%s326 + $0x31] sm:$0x1]
        %v1233 = vld [vmem:[%s326 + $0x35] sm:$0x1]
        %v1234 = vld [vmem:[%s326 + $0x39] sm:$0x1]
        %v1235 = vld [vmem:[%s326 + $0x3d] sm:$0x1]
        %v1236 = vld [vmem:[%s326 + $0x2] sm:$0x1]
        %v1237 = vld [vmem:[%s326 + $0x6] sm:$0x1]
        %v1238 = vld [vmem:[%s326 + $0xa] sm:$0x1]
        %v1239 = vld [vmem:[%s326 + $0xe] sm:$0x1]
        %v1240 = vld [vmem:[%s326 + $0x12] sm:$0x1]
        %v1241 = vld [vmem:[%s326 + $0x16] sm:$0x1]
        %v1242 = vld [vmem:[%s326 + $0x1a] sm:$0x1]
        %v1243 = vld [vmem:[%s326 + $0x1e] sm:$0x1]
        %v1244 = vld [vmem:[%s326 + $0x22] sm:$0x1]
        %v1245 = vld [vmem:[%s326 + $0x26] sm:$0x1]
        %v1246 = vld [vmem:[%s326 + $0x2a] sm:$0x1]
        %v1247 = vld [vmem:[%s326 + $0x2e] sm:$0x1]
        %v1248 = vld [vmem:[%s326 + $0x32] sm:$0x1]
        %v1249 = vld [vmem:[%s326 + $0x36] sm:$0x1]
        %v1250 = vld [vmem:[%s326 + $0x3a] sm:$0x1]
        %v1251 = vld [vmem:[%s326 + $0x3e] sm:$0x1]
        %v1268 = vrot.slane %v1205, 7
        %v1269 = vsel %vm454, %v1268, %v1204
        %v1270 = vrot.slane %v1206, 6
        %v1271 = vsel %vm457, %v1270, %v1269
        %v1272 = vrot.slane %v1207, 5
        %v1273 = vsel %vm460, %v1272, %v1271
        %v1274 = vrot.slane %v1208, 4
        %v1275 = vsel %vm463, %v1274, %v1273
        %v1276 = vrot.slane %v1209, 3
        %v1277 = vsel %vm466, %v1276, %v1275
        %v1278 = vrot.slane %v1210, 2
        %v1279 = vsel %vm469, %v1278, %v1277
        %v1280 = vrot.slane %v1211, 1
        %v1281 = vsel %vm472, %v1280, %v1279
        %v1282 = vrot.slane %v1213, 7
        %v1283 = vsel %vm454, %v1282, %v1212
        %v1284 = vrot.slane %v1214, 6
        %v1285 = vsel %vm457, %v1284, %v1283
        %v1286 = vrot.slane %v1215, 5
        %v1287 = vsel %vm460, %v1286, %v1285
        %v1288 = vrot.slane %v1216, 4
        %v1289 = vsel %vm463, %v1288, %v1287
        %v1290 = vrot.slane %v1217, 3
        %v1291 = vsel %vm466, %v1290, %v1289
        %v1292 = vrot.slane %v1218, 2
        %v1293 = vsel %vm469, %v1292, %v1291
        %v1294 = vrot.slane %v1219, 1
        %v1295 = vsel %vm472, %v1294, %v1293
        %1296 = vrot.lane.b32.xlu0 %v1281, 64
        %v1297 = vpop.permute.xlu0 %1296
        %1298 = vrot.lane.b32.xlu0 %v1295, 64
        %v1299 = vpop.permute.xlu0 %1298
        %v1316 = vrot.slane %v1221, 7
        %v1317 = vsel %vm454, %v1316, %v1220
        %v1318 = vrot.slane %v1222, 6
        %v1319 = vsel %vm457, %v1318, %v1317
        %v1320 = vrot.slane %v1223, 5
        %v1321 = vsel %vm460, %v1320, %v1319
        %v1322 = vrot.slane %v1224, 4
        %v1323 = vsel %vm463, %v1322, %v1321
        %v1324 = vrot.slane %v1225, 3
        %v1325 = vsel %vm466, %v1324, %v1323
        %v1326 = vrot.slane %v1226, 2
        %v1327 = vsel %vm469, %v1326, %v1325
        %v1328 = vrot.slane %v1227, 1
        %v1329 = vsel %vm472, %v1328, %v1327
        %v1330 = vrot.slane %v1229, 7
        %v1331 = vsel %vm454, %v1330, %v1228
        %v1332 = vrot.slane %v1230, 6
        %v1333 = vsel %vm457, %v1332, %v1331
        %v1334 = vrot.slane %v1231, 5
        %v1335 = vsel %vm460, %v1334, %v1333
        %v1336 = vrot.slane %v1232, 4
        %v1337 = vsel %vm463, %v1336, %v1335
        %v1338 = vrot.slane %v1233, 3
        %v1339 = vsel %vm466, %v1338, %v1337
        %v1340 = vrot.slane %v1234, 2
        %v1341 = vsel %vm469, %v1340, %v1339
        %v1342 = vrot.slane %v1235, 1
        %v1343 = vsel %vm472, %v1342, %v1341
        %1344 = vrot.lane.b32.xlu0 %v1329, 64
        %v1345 = vpop.permute.xlu0 %1344
        %1346 = vrot.lane.b32.xlu0 %v1343, 64
        %v1347 = vpop.permute.xlu0 %1346
        %v1348 = vsel %vm532, %v1297, 0
        %v1350 = vsel %vm532, %v1299, 0
        %v1352 = vsel %vm532, %v1345, 0
        %v1354 = vsel %vm532, %v1347, 0
        %1356 = vmatprep.subr.mxu0 0.0
        %1357 = vmatpush1.xpose.msra.mxu0 %v1352
        %1358 = vmatprep.subr.mxu0 0.0
        %1359 = vmatpush1.xpose.msra.mxu0 %v1354
        %1360 = vmatprep.subr.mxu0 0.0
        %1361 = vmatpush1.xpose.msra.mxu0 0.0
        %1362 = vmatprep.subr.mxu0 0.0
        %1363 = vmatpush1.xpose.msra.mxu0 0.0
        %1364 = vmatprep.subr.mxu0 0.0
        %1365 = vmatpush1.xpose.msra.mxu0 0.0
        %1366 = vmatprep.subr.mxu0 0.0
        %1367 = vmatpush1.xpose.msra.mxu0 0.0
        %1368 = vmatprep.subr.mxu0 0.0
        %1369 = vmatpush1.xpose.msra.mxu0 0.0
        %1370 = vmatprep.subr.mxu0 0.0
        %1371 = vmatpush1.xpose.msra.mxu0 0.0
        %1372 = vmatprep.subr.mxu0 0.0
        %1373 = vmatpush1.xpose.msra.mxu0 0.0
        %1374 = vmatprep.subr.mxu0 0.0
        %1375 = vmatpush1.xpose.msra.mxu0 0.0
        %1376 = vmatprep.subr.mxu0 0.0
        %1377 = vmatpush1.xpose.msra.mxu0 0.0
        %1378 = vmatprep.subr.mxu0 0.0
        %1379 = vmatpush1.xpose.msra.mxu0 0.0
        %1380 = vmatprep.subr.mxu0 0.0
        %1381 = vmatpush1.xpose.msra.mxu0 0.0
        %1382 = vmatprep.subr.mxu0 0.0
        %1383 = vmatpush1.xpose.msra.mxu0 0.0
        %1384 = vmatprep.subr.mxu0 0.0
        %1385 = vmatpush1.xpose.msra.mxu0 0.0
        %1386 = vmatprep.subr.mxu0 0.0
        %1387 = vmatpush1.xpose.msra.mxu0 0.0
        %1388 = vmatprep.subr.mxu0 0.0
        %1389 = vmatpush1.xpose.msra.mxu0 0.0
        %1390 = vmatprep.subr.mxu0 0.0
        %1391 = vmatpush1.xpose.msra.mxu0 0.0
        %1392 = vmatprep.subr.mxu0 0.0
        %1393 = vmatpush1.xpose.msra.mxu0 0.0
        %1394 = vmatprep.subr.mxu0 0.0
        %1395 = vmatpush1.xpose.msra.mxu0 0.0
        %1396 = vmatprep.subr.mxu0 0.0
        %1397 = vmatpush1.xpose.msra.mxu0 0.0
        %1398 = vmatprep.subr.mxu0 0.0
        %1399 = vmatpush1.xpose.msra.mxu0 0.0
        %1400 = vmatprep.subr.mxu0 0.0
        %1401 = vmatpush1.xpose.msra.mxu0 0.0
        %1402 = vmatprep.subr.mxu0 0.0
        %1403 = vmatpush1.xpose.msra.mxu0 0.0
        %1404 = vmatprep.subr.mxu0 0.0
        %1405 = vmatpush1.xpose.msra.mxu0 0.0
        %1406 = vmatprep.subr.mxu0 0.0
        %1407 = vmatpush1.xpose.msra.mxu0 0.0
        %1408 = vmatprep.subr.mxu0 0.0
        %1409 = vmatpush1.xpose.msra.mxu0 0.0
        %1410 = vmatprep.subr.mxu0 0.0
        %1411 = vmatpush1.xpose.msra.mxu0 0.0
        %1412 = vmatprep.subr.mxu0 0.0
        %1413 = vmatpush1.xpose.msra.mxu0 0.0
        %1414 = vmatprep.subr.mxu0 0.0
        %1415 = vmatpush1.xpose.msra.mxu0 0.0
        %1416 = vmatprep.subr.mxu0 0.0
        %1417 = vmatpush1.xpose.msra.mxu0 0.0
        %1418 = vmatprep.subr.mxu0 0.0
        %1419 = vmatpush1.xpose.msra.mxu0 0.0
        %1420 = vmatprep.mubr.f32.mxu0 0.0
        %1421 = vmatmul.mubr.f32.gmra.mrb[0].mxu0 %v1348
        %v1422 = vpop.f32.mrb[0].mxu0
        %v1423 = vadd.f32 0.0, %v1422
        %v1424 = vpop.f32.mrb[0].mxu0
        %1425 = vmatprep.mubr.f32.mxu0 0.0
        %1426 = vmatmul.mubr.f32.gmra.mrb[0].mxu0 %v1350
        %v1427 = vpop.f32.mrb[0].mxu0
        %v1428 = vadd.f32 0.0, %v1427
        %v1429 = vpop.f32.mrb[0].mxu0
        %1430 = vdwg.mxu0
        %s1431 = scalar_lea.vmem %s351, 32 [#allocation4]
        %1432 = vst.msk [vmem:[%s1431] sm:$0xff] %vm616, %v1423
        %1433 = vst.msk [vmem:[%s1431 + $0x8] sm:$0xff] %vm616, %v1428
        %v1434 = vadd.f32 %v1423, %v369
        %v1435 = vadd.f32 %v1428, %v369
        %v1436 = vsel %vm616, %v1434, -inf
        %1437 = vmax.xlane.f32.xlu0 %v1436
        %v1438 = vpop.xlane.xlu0 %1437
        %v1439 = vsel %vm616, %v1435, -inf
        %1440 = vmax.xlane.f32.xlu0 %v1439
        %v1441 = vpop.xlane.xlu0 %1440
        %v1442 = vsub.f32 %v1434, %v1438
        %v1443 = vsub.f32 %v1435, %v1441
        %v1444 = vmul.f32 %v1442, 1.442695
        %v1445 = vpow.pop %v1444
        %v1446 = vmul.f32 %v1443, 1.442695
        %v1447 = vpow.pop %v1446
        %v1448 = vsel %vm616, %v1445, 0.0
        %1449 = vadd.xlane.f32.xlu0 %v1448
        %v1450 = vpop.xlane.xlu0 %1449
        %v1451 = vsel %vm616, %v1447, 0.0
        %1452 = vadd.xlane.f32.xlu0 %v1451
        %v1453 = vpop.xlane.xlu0 %1452
        %v1454 = vrcp.pop %v1450
        %v1455 = vmul.f32 1.0, %v1454
        %v1456 = vrcp.pop %v1453
        %v1457 = vmul.f32 1.0, %v1456
        %v1458 = vmul.f32 %v1445, %v1455
        %v1459 = vmul.f32 %v1447, %v1457
        %v1476 = vrot.slane %v1237, 7
        %v1477 = vsel %vm454, %v1476, %v1236
        %v1478 = vrot.slane %v1238, 6
        %v1479 = vsel %vm457, %v1478, %v1477
        %v1480 = vrot.slane %v1239, 5
        %v1481 = vsel %vm460, %v1480, %v1479
        %v1482 = vrot.slane %v1240, 4
        %v1483 = vsel %vm463, %v1482, %v1481
        %v1484 = vrot.slane %v1241, 3
        %v1485 = vsel %vm466, %v1484, %v1483
        %v1486 = vrot.slane %v1242, 2
        %v1487 = vsel %vm469, %v1486, %v1485
        %v1488 = vrot.slane %v1243, 1
        %v1489 = vsel %vm472, %v1488, %v1487
        %v1490 = vrot.slane %v1245, 7
        %v1491 = vsel %vm454, %v1490, %v1244
        %v1492 = vrot.slane %v1246, 6
        %v1493 = vsel %vm457, %v1492, %v1491
        %v1494 = vrot.slane %v1247, 5
        %v1495 = vsel %vm460, %v1494, %v1493
        %v1496 = vrot.slane %v1248, 4
        %v1497 = vsel %vm463, %v1496, %v1495
        %v1498 = vrot.slane %v1249, 3
        %v1499 = vsel %vm466, %v1498, %v1497
        %v1500 = vrot.slane %v1250, 2
        %v1501 = vsel %vm469, %v1500, %v1499
        %v1502 = vrot.slane %v1251, 1
        %v1503 = vsel %vm472, %v1502, %v1501
        %1504 = vrot.lane.b32.xlu0 %v1489, 64
        %v1505 = vpop.permute.xlu0 %1504
        %1506 = vrot.lane.b32.xlu0 %v1503, 64
        %v1507 = vpop.permute.xlu0 %1506
        %v1511 = vsel %vm616, %v1458, 0
        %v1514 = vsel %vm616, %v1459, 0
        %1516 = vmatprep.subr.mxu0 0.0
        %1517 = vmatpush1.msra.mxu0 %v1505
        %1518 = vmatprep.subr.mxu0 0.0
        %1519 = vmatpush1.msra.mxu0 %v1507
        %1520 = vmatprep.subr.mxu0 0.0
        %1521 = vmatpush1.msra.mxu0 0.0
        %1522 = vmatprep.subr.mxu0 0.0
        %1523 = vmatpush1.msra.mxu0 0.0
        %1524 = vmatprep.subr.mxu0 0.0
        %1525 = vmatpush1.msra.mxu0 0.0
        %1526 = vmatprep.subr.mxu0 0.0
        %1527 = vmatpush1.msra.mxu0 0.0
        %1528 = vmatprep.subr.mxu0 0.0
        %1529 = vmatpush1.msra.mxu0 0.0
        %1530 = vmatprep.subr.mxu0 0.0
        %1531 = vmatpush1.msra.mxu0 0.0
        %1532 = vmatprep.subr.mxu0 0.0
        %1533 = vmatpush1.msra.mxu0 0.0
        %1534 = vmatprep.subr.mxu0 0.0
        %1535 = vmatpush1.msra.mxu0 0.0
        %1536 = vmatprep.subr.mxu0 0.0
        %1537 = vmatpush1.msra.mxu0 0.0
        %1538 = vmatprep.subr.mxu0 0.0
        %1539 = vmatpush1.msra.mxu0 0.0
        %1540 = vmatprep.subr.mxu0 0.0
        %1541 = vmatpush1.msra.mxu0 0.0
        %1542 = vmatprep.subr.mxu0 0.0
        %1543 = vmatpush1.msra.mxu0 0.0
        %1544 = vmatprep.subr.mxu0 0.0
        %1545 = vmatpush1.msra.mxu0 0.0
        %1546 = vmatprep.subr.mxu0 0.0
        %1547 = vmatpush1.msra.mxu0 0.0
        %1548 = vmatprep.subr.mxu0 0.0
        %1549 = vmatpush1.msra.mxu0 0.0
        %1550 = vmatprep.subr.mxu0 0.0
        %1551 = vmatpush1.msra.mxu0 0.0
        %1552 = vmatprep.subr.mxu0 0.0
        %1553 = vmatpush1.msra.mxu0 0.0
        %1554 = vmatprep.subr.mxu0 0.0
        %1555 = vmatpush1.msra.mxu0 0.0
        %1556 = vmatprep.subr.mxu0 0.0
        %1557 = vmatpush1.msra.mxu0 0.0
        %1558 = vmatprep.subr.mxu0 0.0
        %1559 = vmatpush1.msra.mxu0 0.0
        %1560 = vmatprep.subr.mxu0 0.0
        %1561 = vmatpush1.msra.mxu0 0.0
        %1562 = vmatprep.subr.mxu0 0.0
        %1563 = vmatpush1.msra.mxu0 0.0
        %1564 = vmatprep.subr.mxu0 0.0
        %1565 = vmatpush1.msra.mxu0 0.0
        %1566 = vmatprep.subr.mxu0 0.0
        %1567 = vmatpush1.msra.mxu0 0.0
        %1568 = vmatprep.subr.mxu0 0.0
        %1569 = vmatpush1.msra.mxu0 0.0
        %1570 = vmatprep.subr.mxu0 0.0
        %1571 = vmatpush1.msra.mxu0 0.0
        %1572 = vmatprep.subr.mxu0 0.0
        %1573 = vmatpush1.msra.mxu0 0.0
        %1574 = vmatprep.subr.mxu0 0.0
        %1575 = vmatpush1.msra.mxu0 0.0
        %1576 = vmatprep.subr.mxu0 0.0
        %1577 = vmatpush1.msra.mxu0 0.0
        %1578 = vmatprep.subr.mxu0 0.0
        %1579 = vmatpush1.msra.mxu0 0.0
        %1580 = vmatprep.mubr.f32.mxu0 0.0
        %1581 = vmatmul.mubr.f32.gmra.mrb[0].mxu0 %v1511
        %v1582 = vpop.f32.mrb[0].mxu0
        %v1583 = vadd.f32 0.0, %v1582
        %v1584 = vpop.f32.mrb[0].mxu0
        %1585 = vmatprep.mubr.f32.mxu0 0.0
        %1586 = vmatmul.mubr.f32.gmra.mrb[0].mxu0 %v1514
        %v1587 = vpop.f32.mrb[0].mxu0
        %v1588 = vadd.f32 0.0, %v1587
        %v1589 = vpop.f32.mrb[0].mxu0
        %1590 = vdwg.mxu0
        %1593 = vrot.lane.b32.xlu0 %v1583, 64
        %v1594 = vpop.permute.xlu0 %1593
        %1595 = vrot.lane.b32.xlu0 %v1588, 64
        %v1596 = vpop.permute.xlu0 %1595
        %vm1599 = vcmask 785920
        %1600 = vst.msk [vmem:[#allocation2] sm:$0xff] %vm1599, %v1594
        %1601 = vst.msk [vmem:[#allocation2 + $0x8] sm:$0xff] %vm1599, %v1596
        %v1602 = vld [vmem:[%s372] sm:$0x1]
        %v1603 = vld [vmem:[%s372 + $0x4] sm:$0x1]
        %v1604 = vld [vmem:[%s372 + $0x8] sm:$0x1]
        %v1605 = vld [vmem:[%s372 + $0xc] sm:$0x1]
        %v1606 = vld [vmem:[%s372 + $0x10] sm:$0x1]
        %v1607 = vld [vmem:[%s372 + $0x14] sm:$0x1]
        %v1608 = vld [vmem:[%s372 + $0x18] sm:$0x1]
        %v1609 = vld [vmem:[%s372 + $0x1c] sm:$0x1]
        %v1610 = vld [vmem:[%s372 + $0x20] sm:$0x1]
        %v1611 = vld [vmem:[%s372 + $0x24] sm:$0x1]
        %v1612 = vld [vmem:[%s372 + $0x28] sm:$0x1]
        %v1613 = vld [vmem:[%s372 + $0x2c] sm:$0x1]
        %v1614 = vld [vmem:[%s372 + $0x30] sm:$0x1]
        %v1615 = vld [vmem:[%s372 + $0x34] sm:$0x1]
        %v1616 = vld [vmem:[%s372 + $0x38] sm:$0x1]
        %v1617 = vld [vmem:[%s372 + $0x3c] sm:$0x1]
        %v1618 = vmul.f32 %v1602, 0.17677669
        %v1619 = vmul.f32 %v1603, 0.17677669
        %v1620 = vmul.f32 %v1604, 0.17677669
        %v1621 = vmul.f32 %v1605, 0.17677669
        %v1622 = vmul.f32 %v1606, 0.17677669
        %v1623 = vmul.f32 %v1607, 0.17677669
        %v1624 = vmul.f32 %v1608, 0.17677669
        %v1625 = vmul.f32 %v1609, 0.17677669
        %v1626 = vmul.f32 %v1610, 0.17677669
        %v1627 = vmul.f32 %v1611, 0.17677669
        %v1628 = vmul.f32 %v1612, 0.17677669
        %v1629 = vmul.f32 %v1613, 0.17677669
        %v1630 = vmul.f32 %v1614, 0.17677669
        %v1631 = vmul.f32 %v1615, 0.17677669
        %v1632 = vmul.f32 %v1616, 0.17677669
        %v1633 = vmul.f32 %v1617, 0.17677669
        %v1634 = vld [vmem:[%s326 + $0x1] sm:$0x1]
        %v1635 = vld [vmem:[%s326 + $0x5] sm:$0x1]
        %v1636 = vld [vmem:[%s326 + $0x9] sm:$0x1]
        %v1637 = vld [vmem:[%s326 + $0xd] sm:$0x1]
        %v1638 = vld [vmem:[%s326 + $0x11] sm:$0x1]
        %v1639 = vld [vmem:[%s326 + $0x15] sm:$0x1]
        %v1640 = vld [vmem:[%s326 + $0x19] sm:$0x1]
        %v1641 = vld [vmem:[%s326 + $0x1d] sm:$0x1]
        %v1642 = vld [vmem:[%s326 + $0x21] sm:$0x1]
        %v1643 = vld [vmem:[%s326 + $0x25] sm:$0x1]
        %v1644 = vld [vmem:[%s326 + $0x29] sm:$0x1]
        %v1645 = vld [vmem:[%s326 + $0x2d] sm:$0x1]
        %v1646 = vld [vmem:[%s326 + $0x31] sm:$0x1]
        %v1647 = vld [vmem:[%s326 + $0x35] sm:$0x1]
        %v1648 = vld [vmem:[%s326 + $0x39] sm:$0x1]
        %v1649 = vld [vmem:[%s326 + $0x3d] sm:$0x1]
        %v1650 = vld [vmem:[%s326 + $0x2] sm:$0x1]
        %v1651 = vld [vmem:[%s326 + $0x6] sm:$0x1]
        %v1652 = vld [vmem:[%s326 + $0xa] sm:$0x1]
        %v1653 = vld [vmem:[%s326 + $0xe] sm:$0x1]
        %v1654 = vld [vmem:[%s326 + $0x12] sm:$0x1]
        %v1655 = vld [vmem:[%s326 + $0x16] sm:$0x1]
        %v1656 = vld [vmem:[%s326 + $0x1a] sm:$0x1]
        %v1657 = vld [vmem:[%s326 + $0x1e] sm:$0x1]
        %v1658 = vld [vmem:[%s326 + $0x22] sm:$0x1]
        %v1659 = vld [vmem:[%s326 + $0x26] sm:$0x1]
        %v1660 = vld [vmem:[%s326 + $0x2a] sm:$0x1]
        %v1661 = vld [vmem:[%s326 + $0x2e] sm:$0x1]
        %v1662 = vld [vmem:[%s326 + $0x32] sm:$0x1]
        %v1663 = vld [vmem:[%s326 + $0x36] sm:$0x1]
        %v1664 = vld [vmem:[%s326 + $0x3a] sm:$0x1]
        %v1665 = vld [vmem:[%s326 + $0x3e] sm:$0x1]
        %v1682 = vrot.slane %v1619, 7
        %v1683 = vsel %vm454, %v1682, %v1618
        %v1684 = vrot.slane %v1620, 6
        %v1685 = vsel %vm457, %v1684, %v1683
        %v1686 = vrot.slane %v1621, 5
        %v1687 = vsel %vm460, %v1686, %v1685
        %v1688 = vrot.slane %v1622, 4
        %v1689 = vsel %vm463, %v1688, %v1687
        %v1690 = vrot.slane %v1623, 3
        %v1691 = vsel %vm466, %v1690, %v1689
        %v1692 = vrot.slane %v1624, 2
        %v1693 = vsel %vm469, %v1692, %v1691
        %v1694 = vrot.slane %v1625, 1
        %v1695 = vsel %vm472, %v1694, %v1693
        %v1696 = vrot.slane %v1627, 7
        %v1697 = vsel %vm454, %v1696, %v1626
        %v1698 = vrot.slane %v1628, 6
        %v1699 = vsel %vm457, %v1698, %v1697
        %v1700 = vrot.slane %v1629, 5
        %v1701 = vsel %vm460, %v1700, %v1699
        %v1702 = vrot.slane %v1630, 4
        %v1703 = vsel %vm463, %v1702, %v1701
        %v1704 = vrot.slane %v1631, 3
        %v1705 = vsel %vm466, %v1704, %v1703
        %v1706 = vrot.slane %v1632, 2
        %v1707 = vsel %vm469, %v1706, %v1705
        %v1708 = vrot.slane %v1633, 1
        %v1709 = vsel %vm472, %v1708, %v1707
        %1710 = vrot.lane.b32.xlu0 %v1695, 32
        %v1711 = vpop.permute.xlu0 %1710
        %1712 = vrot.lane.b32.xlu0 %v1709, 32
        %v1713 = vpop.permute.xlu0 %1712
        %v1730 = vrot.slane %v1635, 7
        %v1731 = vsel %vm454, %v1730, %v1634
        %v1732 = vrot.slane %v1636, 6
        %v1733 = vsel %vm457, %v1732, %v1731
        %v1734 = vrot.slane %v1637, 5
        %v1735 = vsel %vm460, %v1734, %v1733
        %v1736 = vrot.slane %v1638, 4
        %v1737 = vsel %vm463, %v1736, %v1735
        %v1738 = vrot.slane %v1639, 3
        %v1739 = vsel %vm466, %v1738, %v1737
        %v1740 = vrot.slane %v1640, 2
        %v1741 = vsel %vm469, %v1740, %v1739
        %v1742 = vrot.slane %v1641, 1
        %v1743 = vsel %vm472, %v1742, %v1741
        %v1744 = vrot.slane %v1643, 7
        %v1745 = vsel %vm454, %v1744, %v1642
        %v1746 = vrot.slane %v1644, 6
        %v1747 = vsel %vm457, %v1746, %v1745
        %v1748 = vrot.slane %v1645, 5
        %v1749 = vsel %vm460, %v1748, %v1747
        %v1750 = vrot.slane %v1646, 4
        %v1751 = vsel %vm463, %v1750, %v1749
        %v1752 = vrot.slane %v1647, 3
        %v1753 = vsel %vm466, %v1752, %v1751
        %v1754 = vrot.slane %v1648, 2
        %v1755 = vsel %vm469, %v1754, %v1753
        %v1756 = vrot.slane %v1649, 1
        %v1757 = vsel %vm472, %v1756, %v1755
        %1758 = vrot.lane.b32.xlu0 %v1743, 32
        %v1759 = vpop.permute.xlu0 %1758
        %1760 = vrot.lane.b32.xlu0 %v1757, 32
        %v1761 = vpop.permute.xlu0 %1760
        %v1762 = vsel %vm532, %v1711, 0
        %v1764 = vsel %vm532, %v1713, 0
        %v1766 = vsel %vm532, %v1759, 0
        %v1768 = vsel %vm532, %v1761, 0
        %1770 = vmatprep.subr.mxu0 0.0
        %1771 = vmatpush1.xpose.msra.mxu0 %v1766
        %1772 = vmatprep.subr.mxu0 0.0
        %1773 = vmatpush1.xpose.msra.mxu0 %v1768
        %1774 = vmatprep.subr.mxu0 0.0
        %1775 = vmatpush1.xpose.msra.mxu0 0.0
        %1776 = vmatprep.subr.mxu0 0.0
        %1777 = vmatpush1.xpose.msra.mxu0 0.0
        %1778 = vmatprep.subr.mxu0 0.0
        %1779 = vmatpush1.xpose.msra.mxu0 0.0
        %1780 = vmatprep.subr.mxu0 0.0
        %1781 = vmatpush1.xpose.msra.mxu0 0.0
        %1782 = vmatprep.subr.mxu0 0.0
        %1783 = vmatpush1.xpose.msra.mxu0 0.0
        %1784 = vmatprep.subr.mxu0 0.0
        %1785 = vmatpush1.xpose.msra.mxu0 0.0
        %1786 = vmatprep.subr.mxu0 0.0
        %1787 = vmatpush1.xpose.msra.mxu0 0.0
        %1788 = vmatprep.subr.mxu0 0.0
        %1789 = vmatpush1.xpose.msra.mxu0 0.0
        %1790 = vmatprep.subr.mxu0 0.0
        %1791 = vmatpush1.xpose.msra.mxu0 0.0
        %1792 = vmatprep.subr.mxu0 0.0
        %1793 = vmatpush1.xpose.msra.mxu0 0.0
        %1794 = vmatprep.subr.mxu0 0.0
        %1795 = vmatpush1.xpose.msra.mxu0 0.0
        %1796 = vmatprep.subr.mxu0 0.0
        %1797 = vmatpush1.xpose.msra.mxu0 0.0
        %1798 = vmatprep.subr.mxu0 0.0
        %1799 = vmatpush1.xpose.msra.mxu0 0.0
        %1800 = vmatprep.subr.mxu0 0.0
        %1801 = vmatpush1.xpose.msra.mxu0 0.0
        %1802 = vmatprep.subr.mxu0 0.0
        %1803 = vmatpush1.xpose.msra.mxu0 0.0
        %1804 = vmatprep.subr.mxu0 0.0
        %1805 = vmatpush1.xpose.msra.mxu0 0.0
        %1806 = vmatprep.subr.mxu0 0.0
        %1807 = vmatpush1.xpose.msra.mxu0 0.0
        %1808 = vmatprep.subr.mxu0 0.0
        %1809 = vmatpush1.xpose.msra.mxu0 0.0
        %1810 = vmatprep.subr.mxu0 0.0
        %1811 = vmatpush1.xpose.msra.mxu0 0.0
        %1812 = vmatprep.subr.mxu0 0.0
        %1813 = vmatpush1.xpose.msra.mxu0 0.0
        %1814 = vmatprep.subr.mxu0 0.0
        %1815 = vmatpush1.xpose.msra.mxu0 0.0
        %1816 = vmatprep.subr.mxu0 0.0
        %1817 = vmatpush1.xpose.msra.mxu0 0.0
        %1818 = vmatprep.subr.mxu0 0.0
        %1819 = vmatpush1.xpose.msra.mxu0 0.0
        %1820 = vmatprep.subr.mxu0 0.0
        %1821 = vmatpush1.xpose.msra.mxu0 0.0
        %1822 = vmatprep.subr.mxu0 0.0
        %1823 = vmatpush1.xpose.msra.mxu0 0.0
        %1824 = vmatprep.subr.mxu0 0.0
        %1825 = vmatpush1.xpose.msra.mxu0 0.0
        %1826 = vmatprep.subr.mxu0 0.0
        %1827 = vmatpush1.xpose.msra.mxu0 0.0
        %1828 = vmatprep.subr.mxu0 0.0
        %1829 = vmatpush1.xpose.msra.mxu0 0.0
        %1830 = vmatprep.subr.mxu0 0.0
        %1831 = vmatpush1.xpose.msra.mxu0 0.0
        %1832 = vmatprep.subr.mxu0 0.0
        %1833 = vmatpush1.xpose.msra.mxu0 0.0
        %1834 = vmatprep.mubr.f32.mxu0 0.0
        %1835 = vmatmul.mubr.f32.gmra.mrb[0].mxu0 %v1762
        %v1836 = vpop.f32.mrb[0].mxu0
        %v1837 = vadd.f32 0.0, %v1836
        %v1838 = vpop.f32.mrb[0].mxu0
        %1839 = vmatprep.mubr.f32.mxu0 0.0
        %1840 = vmatmul.mubr.f32.gmra.mrb[0].mxu0 %v1764
        %v1841 = vpop.f32.mrb[0].mxu0
        %v1842 = vadd.f32 0.0, %v1841
        %v1843 = vpop.f32.mrb[0].mxu0
        %1844 = vdwg.mxu0
        %s1845 = scalar_lea.vmem %s351, 48 [#allocation4]
        %1846 = vst.msk [vmem:[%s1845] sm:$0xff] %vm616, %v1837
        %1847 = vst.msk [vmem:[%s1845 + $0x8] sm:$0xff] %vm616, %v1842
        %v1848 = vadd.f32 %v1837, %v369
        %v1849 = vadd.f32 %v1842, %v369
        %v1850 = vsel %vm616, %v1848, -inf
        %1851 = vmax.xlane.f32.xlu0 %v1850
        %v1852 = vpop.xlane.xlu0 %1851
        %v1853 = vsel %vm616, %v1849, -inf
        %1854 = vmax.xlane.f32.xlu0 %v1853
        %v1855 = vpop.xlane.xlu0 %1854
        %v1856 = vsub.f32 %v1848, %v1852
        %v1857 = vsub.f32 %v1849, %v1855
        %v1858 = vmul.f32 %v1856, 1.442695
        %v1859 = vpow.pop %v1858
        %v1860 = vmul.f32 %v1857, 1.442695
        %v1861 = vpow.pop %v1860
        %v1862 = vsel %vm616, %v1859, 0.0
        %1863 = vadd.xlane.f32.xlu0 %v1862
        %v1864 = vpop.xlane.xlu0 %1863
        %v1865 = vsel %vm616, %v1861, 0.0
        %1866 = vadd.xlane.f32.xlu0 %v1865
        %v1867 = vpop.xlane.xlu0 %1866
        %v1868 = vrcp.pop %v1864
        %v1869 = vmul.f32 1.0, %v1868
        %v1870 = vrcp.pop %v1867
        %v1871 = vmul.f32 1.0, %v1870
        %v1872 = vmul.f32 %v1859, %v1869
        %v1873 = vmul.f32 %v1861, %v1871
        %v1890 = vrot.slane %v1651, 7
        %v1891 = vsel %vm454, %v1890, %v1650
        %v1892 = vrot.slane %v1652, 6
        %v1893 = vsel %vm457, %v1892, %v1891
        %v1894 = vrot.slane %v1653, 5
        %v1895 = vsel %vm460, %v1894, %v1893
        %v1896 = vrot.slane %v1654, 4
        %v1897 = vsel %vm463, %v1896, %v1895
        %v1898 = vrot.slane %v1655, 3
        %v1899 = vsel %vm466, %v1898, %v1897
        %v1900 = vrot.slane %v1656, 2
        %v1901 = vsel %vm469, %v1900, %v1899
        %v1902 = vrot.slane %v1657, 1
        %v1903 = vsel %vm472, %v1902, %v1901
        %v1904 = vrot.slane %v1659, 7
        %v1905 = vsel %vm454, %v1904, %v1658
        %v1906 = vrot.slane %v1660, 6
        %v1907 = vsel %vm457, %v1906, %v1905
        %v1908 = vrot.slane %v1661, 5
        %v1909 = vsel %vm460, %v1908, %v1907
        %v1910 = vrot.slane %v1662, 4
        %v1911 = vsel %vm463, %v1910, %v1909
        %v1912 = vrot.slane %v1663, 3
        %v1913 = vsel %vm466, %v1912, %v1911
        %v1914 = vrot.slane %v1664, 2
        %v1915 = vsel %vm469, %v1914, %v1913
        %v1916 = vrot.slane %v1665, 1
        %v1917 = vsel %vm472, %v1916, %v1915
        %1918 = vrot.lane.b32.xlu0 %v1903, 32
        %v1919 = vpop.permute.xlu0 %1918
        %1920 = vrot.lane.b32.xlu0 %v1917, 32
        %v1921 = vpop.permute.xlu0 %1920
        %v1925 = vsel %vm616, %v1872, 0
        %v1928 = vsel %vm616, %v1873, 0
        %1930 = vmatprep.subr.mxu0 0.0
        %1931 = vmatpush1.msra.mxu0 %v1919
        %1932 = vmatprep.subr.mxu0 0.0
        %1933 = vmatpush1.msra.mxu0 %v1921
        %1934 = vmatprep.subr.mxu0 0.0
        %1935 = vmatpush1.msra.mxu0 0.0
        %1936 = vmatprep.subr.mxu0 0.0
        %1937 = vmatpush1.msra.mxu0 0.0
        %1938 = vmatprep.subr.mxu0 0.0
        %1939 = vmatpush1.msra.mxu0 0.0
        %1940 = vmatprep.subr.mxu0 0.0
        %1941 = vmatpush1.msra.mxu0 0.0
        %1942 = vmatprep.subr.mxu0 0.0
        %1943 = vmatpush1.msra.mxu0 0.0
        %1944 = vmatprep.subr.mxu0 0.0
        %1945 = vmatpush1.msra.mxu0 0.0
        %1946 = vmatprep.subr.mxu0 0.0
        %1947 = vmatpush1.msra.mxu0 0.0
        %1948 = vmatprep.subr.mxu0 0.0
        %1949 = vmatpush1.msra.mxu0 0.0
        %1950 = vmatprep.subr.mxu0 0.0
        %1951 = vmatpush1.msra.mxu0 0.0
        %1952 = vmatprep.subr.mxu0 0.0
        %1953 = vmatpush1.msra.mxu0 0.0
        %1954 = vmatprep.subr.mxu0 0.0
        %1955 = vmatpush1.msra.mxu0 0.0
        %1956 = vmatprep.subr.mxu0 0.0
        %1957 = vmatpush1.msra.mxu0 0.0
        %1958 = vmatprep.subr.mxu0 0.0
        %1959 = vmatpush1.msra.mxu0 0.0
        %1960 = vmatprep.subr.mxu0 0.0
        %1961 = vmatpush1.msra.mxu0 0.0
        %1962 = vmatprep.subr.mxu0 0.0
        %1963 = vmatpush1.msra.mxu0 0.0
        %1964 = vmatprep.subr.mxu0 0.0
        %1965 = vmatpush1.msra.mxu0 0.0
        %1966 = vmatprep.subr.mxu0 0.0
        %1967 = vmatpush1.msra.mxu0 0.0
        %1968 = vmatprep.subr.mxu0 0.0
        %1969 = vmatpush1.msra.mxu0 0.0
        %1970 = vmatprep.subr.mxu0 0.0
        %1971 = vmatpush1.msra.mxu0 0.0
        %1972 = vmatprep.subr.mxu0 0.0
        %1973 = vmatpush1.msra.mxu0 0.0
        %1974 = vmatprep.subr.mxu0 0.0
        %1975 = vmatpush1.msra.mxu0 0.0
        %1976 = vmatprep.subr.mxu0 0.0
        %1977 = vmatpush1.msra.mxu0 0.0
        %1978 = vmatprep.subr.mxu0 0.0
        %1979 = vmatpush1.msra.mxu0 0.0
        %1980 = vmatprep.subr.mxu0 0.0
        %1981 = vmatpush1.msra.mxu0 0.0
        %1982 = vmatprep.subr.mxu0 0.0
        %1983 = vmatpush1.msra.mxu0 0.0
        %1984 = vmatprep.subr.mxu0 0.0
        %1985 = vmatpush1.msra.mxu0 0.0
        %1986 = vmatprep.subr.mxu0 0.0
        %1987 = vmatpush1.msra.mxu0 0.0
        %1988 = vmatprep.subr.mxu0 0.0
        %1989 = vmatpush1.msra.mxu0 0.0
        %1990 = vmatprep.subr.mxu0 0.0
        %1991 = vmatpush1.msra.mxu0 0.0
        %1992 = vmatprep.subr.mxu0 0.0
        %1993 = vmatpush1.msra.mxu0 0.0
        %1994 = vmatprep.mubr.f32.mxu0 0.0
        %1995 = vmatmul.mubr.f32.gmra.mrb[0].mxu0 %v1925
        %v1996 = vpop.f32.mrb[0].mxu0
        %v1997 = vadd.f32 0.0, %v1996
        %v1998 = vpop.f32.mrb[0].mxu0
        %1999 = vmatprep.mubr.f32.mxu0 0.0
        %2000 = vmatmul.mubr.f32.gmra.mrb[0].mxu0 %v1928
        %v2001 = vpop.f32.mrb[0].mxu0
        %v2002 = vadd.f32 0.0, %v2001
        %v2003 = vpop.f32.mrb[0].mxu0
        %2004 = vdwg.mxu0
        %2007 = vrot.lane.b32.xlu0 %v1997, 96
        %v2008 = vpop.permute.xlu0 %2007
        %2009 = vrot.lane.b32.xlu0 %v2002, 96
        %v2010 = vpop.permute.xlu0 %2009
        %vm2013 = vcmask 1048320
        %2014 = vst.msk [vmem:[#allocation2] sm:$0xff] %vm2013, %v2008
        %2015 = vst.msk [vmem:[#allocation2 + $0x8] sm:$0xff] %vm2013, %v2010
        %v2016 = vld [vmem:[#allocation2] sm:$0xff]
        %v2017 = vld [vmem:[#allocation2 + $0x8] sm:$0xff]
        %v2018 = vld [vmem:[%s2] sm:$0xff]
        %v2019 = vld [vmem:[%s2 + $0x8] sm:$0xff]
        %v2020 = vld [vmem:[%s2 + $0x10] sm:$0xff]
        %v2021 = vld [vmem:[%s2 + $0x18] sm:$0xff]
        %v2022 = vld [vmem:[%s2 + $0x20] sm:$0xff]
        %v2023 = vld [vmem:[%s2 + $0x28] sm:$0xff]
        %v2024 = vld [vmem:[%s2 + $0x30] sm:$0xff]
        %v2025 = vld [vmem:[%s2 + $0x38] sm:$0xff]
        %v2026 = vld [vmem:[%s2 + $0x40] sm:$0xff]
        %v2027 = vld [vmem:[%s2 + $0x48] sm:$0xff]
        %v2028 = vld [vmem:[%s2 + $0x50] sm:$0xff]
        %v2029 = vld [vmem:[%s2 + $0x58] sm:$0xff]
        %v2030 = vld [vmem:[%s2 + $0x60] sm:$0xff]
        %v2031 = vld [vmem:[%s2 + $0x68] sm:$0xff]
        %v2032 = vld [vmem:[%s2 + $0x70] sm:$0xff]
        %v2033 = vld [vmem:[%s2 + $0x78] sm:$0xff]
        %v2034 = vld [vmem:[%s3] sm:$0x1]
        %v2036 = vlaneseq
        %v2037 = vshrl.u32 %v2036, 7
        %v2038 = vsub.s32 0, %v2037
        %v2039 = vrot.slane %v2034, %v2038
        %2041 = vmatprep.subr.mxu0 0.0
        %2042 = vmatpush1.msra.mxu0 %v2018
        %2043 = vmatprep.subr.mxu0 0.0
        %2044 = vmatpush1.msra.mxu0 %v2019
        %2045 = vmatprep.subr.mxu0 0.0
        %2046 = vmatpush1.msra.mxu0 %v2020
        %2047 = vmatprep.subr.mxu0 0.0
        %2048 = vmatpush1.msra.mxu0 %v2021
        %2049 = vmatprep.subr.mxu0 0.0
        %2050 = vmatpush1.msra.mxu0 %v2022
        %2051 = vmatprep.subr.mxu0 0.0
        %2052 = vmatpush1.msra.mxu0 %v2023
        %2053 = vmatprep.subr.mxu0 0.0
        %2054 = vmatpush1.msra.mxu0 %v2024
        %2055 = vmatprep.subr.mxu0 0.0
        %2056 = vmatpush1.msra.mxu0 %v2025
        %2057 = vmatprep.subr.mxu0 0.0
        %2058 = vmatpush1.msra.mxu0 %v2026
        %2059 = vmatprep.subr.mxu0 0.0
        %2060 = vmatpush1.msra.mxu0 %v2027
        %2061 = vmatprep.subr.mxu0 0.0
        %2062 = vmatpush1.msra.mxu0 %v2028
        %2063 = vmatprep.subr.mxu0 0.0
        %2064 = vmatpush1.msra.mxu0 %v2029
        %2065 = vmatprep.subr.mxu0 0.0
        %2066 = vmatpush1.msra.mxu0 %v2030
        %2067 = vmatprep.subr.mxu0 0.0
        %2068 = vmatpush1.msra.mxu0 %v2031
        %2069 = vmatprep.subr.mxu0 0.0
        %2070 = vmatpush1.msra.mxu0 %v2032
        %2071 = vmatprep.subr.mxu0 0.0
        %2072 = vmatpush1.msra.mxu0 %v2033
        %2073 = vmatprep.subr.mxu0 0.0
        %2074 = vmatpush1.msra.mxu0 0.0
        %2075 = vmatprep.subr.mxu0 0.0
        %2076 = vmatpush1.msra.mxu0 0.0
        %2077 = vmatprep.subr.mxu0 0.0
        %2078 = vmatpush1.msra.mxu0 0.0
        %2079 = vmatprep.subr.mxu0 0.0
        %2080 = vmatpush1.msra.mxu0 0.0
        %2081 = vmatprep.subr.mxu0 0.0
        %2082 = vmatpush1.msra.mxu0 0.0
        %2083 = vmatprep.subr.mxu0 0.0
        %2084 = vmatpush1.msra.mxu0 0.0
        %2085 = vmatprep.subr.mxu0 0.0
        %2086 = vmatpush1.msra.mxu0 0.0
        %2087 = vmatprep.subr.mxu0 0.0
        %2088 = vmatpush1.msra.mxu0 0.0
        %2089 = vmatprep.subr.mxu0 0.0
        %2090 = vmatpush1.msra.mxu0 0.0
        %2091 = vmatprep.subr.mxu0 0.0
        %2092 = vmatpush1.msra.mxu0 0.0
        %2093 = vmatprep.subr.mxu0 0.0
        %2094 = vmatpush1.msra.mxu0 0.0
        %2095 = vmatprep.subr.mxu0 0.0
        %2096 = vmatpush1.msra.mxu0 0.0
        %2097 = vmatprep.subr.mxu0 0.0
        %2098 = vmatpush1.msra.mxu0 0.0
        %2099 = vmatprep.subr.mxu0 0.0
        %2100 = vmatpush1.msra.mxu0 0.0
        %2101 = vmatprep.subr.mxu0 0.0
        %2102 = vmatpush1.msra.mxu0 0.0
        %2103 = vmatprep.subr.mxu0 0.0
        %2104 = vmatpush1.msra.mxu0 0.0
        %2105 = vmatprep.mubr.f32.mxu0 0.0
        %2106 = vmatmul.mubr.f32.gmra.mrb[0].mxu0 %v2016
        %v2107 = vpop.f32.mrb[0].mxu0
        %v2108 = vadd.f32 %v2039, %v2107
        %v2109 = vpop.f32.mrb[0].mxu0
        %2110 = vmatprep.mubr.f32.mxu0 0.0
        %2111 = vmatmul.mubr.f32.gmra.mrb[0].mxu0 %v2017
        %v2112 = vpop.f32.mrb[0].mxu0
        %v2113 = vadd.f32 %v2039, %v2112
        %v2114 = vpop.f32.mrb[0].mxu0
        %2115 = vdwg.mxu0
        %2116 = vst [vmem:[%s357] sm:$0xff] %v2108
        %2117 = vst [vmem:[%s357 + $0x8] sm:$0xff] %v2113
        %s2118 = sand.u32 %s136, 1
        %s2119 = scalar_lea.sflag [#allocation5], %s2118
        %s2120 = sand.u32 %s136, 1
        %s2121 = smul.addr %s2120, 64
        %s2122 = scalar_lea.vmem [#allocation4], %s2121
        %s2123 = sand.u32 %s164, 1
        %s2124 = sand.u32 %s164, 1
        %s2125 = smul.addr %s2124, 16
        %s2126 = scalar_lea.vmem [#allocation6], %s2125
        // Predicated region
        $region78: #{_lambda_.3} parent=72 // pred_check
          %p2127 = pneg %p146
        $region79: #{_lambda_.3} parent=72 // pred_check_branch
          %2129 = sbr.rel (%p2127) target = $region81
        $region80: #{_lambda_.3} parent=72 // pred_region
          %s2130 = smul.u32 2, %s25
          %s2132 = ssub.s32 1024, 1024
          %2133 = vsyncadd %s2119, %s2132
          %s2134 = smul.addr %s24, 8
          %s2135 = sadd.s32 %s2130, %s2134
          %s2136 = smul.addr %s2135, 128
          %s2137 = scalar_lea.hbm %s4, %s2136
          %s2138 = sshll.u32 %s2122, 4
          %s2139 = int_to_ptr.vmem [resolvable:$true] %s2138
          %2144 = dma.vmem_to_hbm [thread:$0]  %s2139, 1024, %s2137, %s2119, 128, 128, 8
        $region81: #{_lambda_.3} parent=72 // pred_fallthru
          _
        // Predicated region
        $region82: #{_lambda_.3} parent=72 // pred_check
          %p2145 = pneg %p174
        $region83: #{_lambda_.3} parent=72 // pred_check_branch
          %2147 = sbr.rel (%p2145) target = $region85
        $region84: #{_lambda_.3} parent=72 // pred_region
          %s2148 = smul.u32 2, %s25
          %s2149 = smul.addr %s2148, 2
          %s2150 = sadd.s32 %s24, %s2149
          %s2151 = smul.addr %s2150, 8
          %s2152 = scalar_lea.vmem %s5, %s2151
          // Predicated region
          $region86: #{_lambda_.3} parent=84 // pred_check
            _
          $region87: #{_lambda_.3} parent=84 // pred_check_branch
            %2154 = sbr.rel (0) target = $region89
          $region88: #{_lambda_.3} parent=84 // pred_region
            // Predicated region
            $region90: #{_lambda_.3} parent=88 // pred_check
              _
            $region91: #{_lambda_.3} parent=88 // pred_check_branch
              %2156 = sbr.rel (0) target = $region93
            $region92: #{_lambda_.3} parent=88 // pred_region
              // Predicated region
              $region105: #{_lambda_.3} parent=92 // pred_check
                _
              $region106: #{_lambda_.3} parent=92 // pred_check_branch
                %2173 = sbr.rel (0) target = $region108
              $region107: #{_lambda_.3} parent=92 // pred_region
                loop: start=0, step=1, limit=1
                $region109: #{_lambda_.3} parent=107 // loop_pre_header
                  _
                $region110: #{_lambda_.3} parent=107 // loop_header
                  %s2175 = sphi 0, %s2179
                  %p2176 = scmp.ge.s32.totalorder %s2175, 1
                  %s2180 = sphi %s2126, %s2126
                  %s2181 = sphi %s2152, %s2152
                $region111: #{_lambda_.3} parent=107 // loop_header_branch
                  %2178 = sbr.rel (%p2176) target = $region115
                $region112: #{_lambda_.3} parent=107 // loop_body
                  %v2182 = vld [vmem:[%s2180] sm:$0xff]
                  %2183 = vst [vmem:[%s2181] sm:$0xff] %v2182
                  %v2184 = vld [vmem:[%s2180 + $0x8] sm:$0xff]
                  %2185 = vst [vmem:[%s2181 + $0x10] sm:$0xff] %v2184
                $region113: #{_lambda_.3} parent=107 // loop_footer
                  %s2179 = sadd.s32 1, %s2175
                $region114: #{_lambda_.3} parent=107 // loop_footer_branch
                  %2174 = sbr.rel target = $region110
                $region115: #{_lambda_.3} parent=107 // loop_exit
                  _
              $region108: #{_lambda_.3} parent=92 // pred_fallthru
                _
              // Predicated region
              $region116: #{_lambda_.3} parent=92 // pred_check
                _
              $region117: #{_lambda_.3} parent=92 // pred_check_branch
                %2187 = sbr.rel target = $region119
              $region118: #{_lambda_.3} parent=92 // pred_region
                _
              $region119: #{_lambda_.3} parent=92 // pred_fallthru
                _
            $region93: #{_lambda_.3} parent=88 // pred_fallthru
              _
            // Predicated region
            $region94: #{_lambda_.3} parent=88 // pred_check
              _
            $region95: #{_lambda_.3} parent=88 // pred_check_branch
              %2158 = sbr.rel target = $region97
            $region96: #{_lambda_.3} parent=88 // pred_region
              loop: start=0, step=1, limit=1
              $region98: #{_lambda_.3} parent=96 // loop_pre_header
                _
              $region99: #{_lambda_.3} parent=96 // loop_header
                %s2161 = sphi 0, %s2165
                %p2162 = scmp.ge.s32.totalorder %s2161, 1
                %s2166 = sphi %s2126, %s2126
                %s2167 = sphi %s2152, %s2152
              $region100: #{_lambda_.3} parent=96 // loop_header_branch
                %2164 = sbr.rel (%p2162) target = $region104
              $region101: #{_lambda_.3} parent=96 // loop_body
                %v2168 = vld [vmem:[%s2166] sm:$0xff]
                %2169 = vst [vmem:[%s2167] sm:$0xff] %v2168
                %v2170 = vld [vmem:[%s2166 + $0x8] sm:$0xff]
                %2171 = vst [vmem:[%s2167 + $0x10] sm:$0xff] %v2170
              $region102: #{_lambda_.3} parent=96 // loop_footer
                %s2165 = sadd.s32 1, %s2161
              $region103: #{_lambda_.3} parent=96 // loop_footer_branch
                %2160 = sbr.rel target = $region99
              $region104: #{_lambda_.3} parent=96 // loop_exit
                _
            $region97: #{_lambda_.3} parent=88 // pred_fallthru
              _
          $region89: #{_lambda_.3} parent=84 // pred_fallthru
            _
          %2188 = vnop
        $region85: #{_lambda_.3} parent=72 // pred_fallthru
          _
      $region73: #{_lambda_.3} parent=5 // pred_fallthru
        _
      %p2189 = scmp.le.s32.totalorder 2, %s15
      // Predicated region
      $region120: #{_lambda_.3} parent=5 // pred_check
        %p2190 = pneg %p2189
      $region121: #{_lambda_.3} parent=5 // pred_check_branch
        %2192 = sbr.rel (%p2190) target = $region123
      $region122: #{_lambda_.3} parent=5 // pred_region
        %s2193 = ssub.s32 %s15, 2
        // Predicated region
        $region124: #{_lambda_.3} parent=122 // pred_check
          %p2194 = pneg %p152
        $region125: #{_lambda_.3} parent=122 // pred_check_branch
          %2196 = sbr.rel (%p2194) target = $region127
        $region126: #{_lambda_.3} parent=122 // pred_region
          %s2197 = sand.u32 %s137, 1
          %s2198 = scalar_lea.sflag [#allocation5], %s2197
          %s2199 = sand.u32 %s137, 1
          %s2200 = smul.addr %s2199, 64
          %s2201 = scalar_lea.vmem [#allocation4], %s2200
          %2202 = dma.done %s2198, 1024
        $region127: #{_lambda_.3} parent=122 // pred_fallthru
          _
        // Predicated region
        $region128: #{_lambda_.3} parent=122 // pred_check
          %p2203 = pneg %p180
        $region129: #{_lambda_.3} parent=122 // pred_check_branch
          %2205 = sbr.rel (%p2203) target = $region131
        $region130: #{_lambda_.3} parent=122 // pred_region
          %s2206 = sand.u32 %s165, 1
          %s2207 = sand.u32 %s165, 1
          %s2208 = smul.addr %s2207, 16
          %s2209 = scalar_lea.vmem [#allocation6], %s2208
        $region131: #{_lambda_.3} parent=122 // pred_fallthru
          _
      $region123: #{_lambda_.3} parent=5 // pred_fallthru
        _
    $region6: #{_lambda_.3} parent=1 // loop_footer
      %s19 = sadd.s32 1, %s15
    $region7: #{_lambda_.3} parent=1 // loop_footer_branch
      %14 = sbr.rel target = $region3
    $region8: #{_lambda_.3} parent=1 // loop_exit
      _
    %2210 = vsyncpa [#allocation5], 1
    %s2211 = scalar_lea.sflag [#allocation5], 1
    %2212 = vsyncpa %s2211, 1

</llo_original>
